<compile_context>
chip_gen: v6e
topology: v6e:2x2x1
jax: 0.10.0
libtpu: 0.0.40
codegen_flags: <defaults>
</compile_context>

<pallas_src>
import math

import numpy as np
import jax
import jax.numpy as jnp
from jax import lax
from jax.experimental import pallas as pl
from jax.experimental.pallas import tpu as pltpu

DIM = 32            # `dim` of the Attention module
HEADS = 2           # ca_num_heads
SEQ = 16            # H (sequence length)
BATCH = 8           # 8*16 = 128 -> full lane width, unmasked stores
LN_EPS = 1e-6       # custom LayerNorm eps
BN_EPS = 1e-5       # nn.BatchNorm1d default eps

_SQRT2 = math.sqrt(2.0)


def _gelu(x):
    # exact (erf-based) GELU == torch.nn.GELU() default
    return 0.5 * x * (1.0 + lax.erf(x / _SQRT2))


# --------------------------------------------------------------------------------------
# Pallas kernel: whole forward pass, single grid-less invocation, everything in VMEM.
# --------------------------------------------------------------------------------------
def _attention_kernel(
    x_ref,        # (C, B*H)      activations: channels on sublanes, batch*seq on lanes
    shift_ref,    # (5*BH+8, BH)  stacked depthwise shift matrices + colsum rows + ones row
    vs_w_ref,     # (2C, C)       fused [v ; s] pointwise weights
    lc_w_ref,     # (C, 5)        fused depthwise taps (head0 rows zero-padded to 5 taps)
    lc_const_ref, # (C, 8)        [lc_w * s_b | lc_b | 0 0]  (bias folds for the depthwise matmul)
    p0_w_ref,     # (2C, C)       densified grouped proj0 weight
    p1_w_ref,     # (C, 2C)       proj1 weight
    pr_w_ref,     # (C, C)        final proj weight
    vec_ref,      # (2C, 8)       packed per-channel vectors (one column each)
    o_ref,        # (C, B*H)      lane-dense output
):
    x = x_ref[...]                       # f32 (C, BH)
    C = x.shape[0]

    vec = vec_ref[...]                   # (2C, 8)
    ln_w, ln_b = vec[:C, 0:1], vec[:C, 1:2]
    v_b = vec[:C, 2:3]
    p0_b = vec[:, 3:4]                   # (2C, 1)
    p1_b = vec[:C, 4:5]
    bn_w, bn_b = vec[:C, 5:6], vec[:C, 6:7]
    pr_b = vec[:C, 7:8]

    # ---- LayerNorm over the channel axis (sublanes) + GELU ----
    u = jnp.mean(x, axis=0, keepdims=True)
    xc = x - u
    var = jnp.mean(xc * xc, axis=0, keepdims=True)
    xa = _gelu(ln_w * (xc * lax.rsqrt(var + LN_EPS)) + ln_b)

    # ---- fused v / s pointwise convs: single (2C, C) @ (C, BH) MXU matmul ----
    # v gets its bias here; the s bias is folded into the depthwise matmul below.
    vs = jnp.dot(vs_w_ref[...], xa, preferred_element_type=jnp.float32)
    v = vs[:C, :] + v_b
    s_raw = vs[C:, :]                    # channel order: [head0 | head1], NO bias yet

    # ---- per-head depthwise conv along H ('same' padding) as ONE stacked matmul ----
    # lhs columns t*BH..(t+1)*BH-1 hold lc_w[:, t] * s_raw; the trailing constant
    # block carries (lc_w * s_b) per tap and lc_b.  The rhs stacks the 5 shift
    # matrices (batch-boundary zero padding baked in), the per-tap column-sum rows
    # (for the folded s_b) and a ones row (for lc_b).  One MXU push/pop; the tap
    # reduction happens in the MXU accumulator.
    lc_w = lc_w_ref[...]                 # (C, 5)
    lhs = jnp.concatenate(
        [lc_w[:, t:t + 1] * s_raw for t in range(5)] + [lc_const_ref[...]], axis=1)
    s_cat = jnp.dot(lhs, shift_ref[...], preferred_element_type=jnp.float32)

    # ---- grouped proj0 (densified) + GELU, then proj1 ----
    h0 = _gelu(jnp.dot(p0_w_ref[...], s_cat, preferred_element_type=jnp.float32) + p0_b)
    s_out = jnp.dot(p1_w_ref[...], h0, preferred_element_type=jnp.float32) + p1_b

    # ---- gate ----
    y = s_out * v

    # ---- BatchNorm1d (training mode: biased per-channel stats over (B,H) = lanes), GELU ----
    mu = jnp.mean(y, axis=1, keepdims=True)
    yc = y - mu
    bvar = jnp.mean(yc * yc, axis=1, keepdims=True)
    y = _gelu(bn_w * (yc * lax.rsqrt(bvar + BN_EPS)) + bn_b)
    # TODO(synk): BatchNorm running-stat update (momentum=0.9) is training-time state
    # mutation only; it does not affect the forward output and is intentionally omitted.

    # ---- final pointwise projection, written lane-dense as (C, B*H) ----
    o_ref[...] = (jnp.dot(pr_w_ref[...], y, preferred_element_type=jnp.float32)
                  + pr_b).astype(o_ref.dtype)


# --------------------------------------------------------------------------------------
# Wrapper / glue
# --------------------------------------------------------------------------------------
def _depthwise_shift_stacked(B, H):
    """Stacked rhs for the single depthwise matmul, shape (5*BH + 8, BH).

    Rows t*BH + i : S_t[i, L] = 1 iff i == L + (t-2) and 0 <= (L % H) + (t-2) < H
                    (shift by d = t-2 within each per-batch H window, zero padded).
    Rows 5*BH + t (t<5): column sums of S_t (validity indicator) -> folds s_b per tap.
    Row  5*BH + 5      : ones  -> folds lc_b.
    Rows 5*BH + 6..7   : zeros -> pads K to a multiple of 8.
    """
    BH = B * H
    L = np.arange(BH)
    h = L % H
    S = np.zeros((5, BH, BH), np.float32)
    for t in range(5):
        d = t - 2
        valid = (h + d >= 0) & (h + d < H)
        S[t, (L + d)[valid], L[valid]] = 1.0
    colsum = S.sum(axis=1)                                   # (5, BH), entries 0/1
    stacked = np.concatenate(
        [S.reshape(5 * BH, BH), colsum,
         np.ones((1, BH), np.float32), np.zeros((2, BH), np.float32)], axis=0)
    return jnp.asarray(stacked)                              # (5*BH + 8, BH)


def pack_params(p, batch, seq):
    """Fuse / pack raw parameters into the kernel's operand layout (done once)."""
    C = DIM
    vs_w = jnp.concatenate([p["v_w"], p["s_w"]], axis=0)                       # (2C, C)
    lc_w = jnp.concatenate([jnp.pad(p["lc0_w"], ((0, 0), (1, 1))),             # k=3 -> 5 taps
                            p["lc1_w"]], axis=0)                               # (C, 5)
    lc_b = jnp.concatenate([p["lc0_b"], p["lc1_b"]])                           # (C,)
    # constant columns folded into the stacked depthwise matmul:
    #   [ lc_w * s_b (per tap) | lc_b | two zero columns for K alignment ]
    lc_const = jnp.concatenate(
        [lc_w * p["s_b"][:, None], lc_b[:, None], jnp.zeros((C, 2), jnp.float32)],
        axis=1)                                                                # (C, 8)

    def col(v):
        v = jnp.asarray(v, jnp.float32)
        return jnp.pad(v, (0, 2 * C - v.shape[0]))[:, None]                    # (2C, 1)

    vec = jnp.concatenate([
        col(p["ln_w"]), col(p["ln_b"]), col(p["v_b"]), col(p["p0_b"]),
        col(p["p1_b"]), col(p["bn_w"]), col(p["bn_b"]), col(p["pr_b"]),
    ], axis=1)                                                                 # (2C, 8)

    return {"vs_w": vs_w, "lc_w": lc_w, "lc_const": lc_const,
            "p0_w": p["p0_w_dense"], "p1_w": p["p1_w"], "pr_w": p["pr_w"],
            "vec": vec, "shift": _depthwise_shift_stacked(batch, seq)}


def attention_forward(x, packed):
    B, C, H = x.shape
    BH = B * H
    assert packed["shift"].shape[1] == BH, "pack_params was built for a different (B, H)"
    # layout plumbing: present a lane-dense (C, B*H) slab to the kernel
    x2d = jnp.transpose(x, (1, 0, 2)).reshape(C, BH)
    out2d = pl.pallas_call(
        _attention_kernel,
        out_shape=jax.ShapeDtypeStruct((C, BH), jnp.float32),
        in_specs=[pl.BlockSpec(memory_space=pltpu.MemorySpace.VMEM)] * 9,
        out_specs=pl.BlockSpec(memory_space=pltpu.MemorySpace.VMEM),
    )(x2d, packed["shift"], packed["vs_w"], packed["lc_w"], packed["lc_const"],
      packed["p0_w"], packed["p1_w"], packed["pr_w"], packed["vec"])
    return out2d.reshape(C, B, H).transpose(1, 0, 2)


def densify_proj0(w_raw, dim, heads):
    # Grouped Conv1d(dim, 2*dim, k=1, groups=dim//heads): raw weight (2*dim, heads).
    # Dense (2*dim, dim) matrix whose columns index the *concatenated*
    # [head0 channels | head1 channels] order produced inside the kernel.
    Ch = dim // heads
    out_pg = 2 * heads
    dense = jnp.zeros((2 * dim, dim), jnp.float32)
    o = jnp.arange(2 * dim)
    g = o // out_pg
    for h in range(heads):
        dense = dense.at[o, h * Ch + g].set(w_raw[:, h])
    return dense


def init_params(key):
    C, Ch = DIM, DIM // HEADS
    ks = jax.random.split(key, 16)

    def u(k, shape, fan_in):
        bound = 1.0 / math.sqrt(fan_in)
        return jax.random.uniform(k, shape, jnp.float32, minval=-bound, maxval=bound)

    p = {
        "ln_w": jnp.ones((C,), jnp.float32),
        "ln_b": jnp.zeros((C,), jnp.float32),
        "v_w": u(ks[0], (C, C), C), "v_b": u(ks[1], (C,), C),
        "s_w": u(ks[2], (C, C), C), "s_b": u(ks[3], (C,), C),
        "lc0_w": u(ks[4], (Ch, 3), 3), "lc0_b": u(ks[5], (Ch,), 3),
        "lc1_w": u(ks[6], (Ch, 5), 5), "lc1_b": u(ks[7], (Ch,), 5),
        "p0_w_raw": u(ks[8], (2 * C, HEADS), HEADS), "p0_b": u(ks[9], (2 * C,), HEADS),
        "p1_w": u(ks[10], (C, 2 * C), 2 * C), "p1_b": u(ks[11], (C,), 2 * C),
        "bn_w": jnp.ones((C,), jnp.float32),
        "bn_b": jnp.zeros((C,), jnp.float32),
        "pr_w": u(ks[12], (C, C), C), "pr_b": u(ks[13], (C,), C),
    }
    p["p0_w_dense"] = densify_proj0(p["p0_w_raw"], C, HEADS)
    return p


# Pure-JAX reference that mirrors the PyTorch forward exactly (for a sanity check).
def reference_forward(x, p):
    B, C, H = x.shape
    Ch = C // HEADS
    hp = jax.lax.Precision.HIGHEST
    u = x.mean(1, keepdims=True)
    s = ((x - u) ** 2).mean(1, keepdims=True)
    xh = (x - u) / jnp.sqrt(s + LN_EPS)
    xh = p["ln_w"][None, :, None] * xh + p["ln_b"][None, :, None]
    xh = _gelu(xh)

    def conv1x1(w, b, inp):
        return jnp.einsum("oc,bch->boh", w, inp, precision=hp) + b[None, :, None]

    v = conv1x1(p["v_w"], p["v_b"], xh)
    s_full = conv1x1(p["s_w"], p["s_b"], xh)
    s_heads = s_full.reshape(B, HEADS, Ch, H)

    def depthwise(inp, w, b, pad):
        k = w.shape[1]
        xp = jnp.pad(inp, ((0, 0), (0, 0), (pad, pad)))
        out = jnp.broadcast_to(b[None, :, None], inp.shape).astype(jnp.float32)
        for t in range(k):
            out = out + w[None, :, t, None] * xp[:, :, t:t + H]
        return out

    s0 = depthwise(s_heads[:, 0], p["lc0_w"], p["lc0_b"], 1)
    s1 = depthwise(s_heads[:, 1], p["lc1_w"], p["lc1_b"], 2)
    s_out = jnp.stack([s0, s1], axis=2).reshape(B, C, H)   # (group, head) interleave

    w0 = p["p0_w_raw"].reshape(Ch, 2 * HEADS, HEADS)
    hh = s_out.reshape(B, Ch, HEADS, H)
    y0 = (jnp.einsum("goi,bgih->bgoh", w0, hh, precision=hp).reshape(B, 2 * C, H)
          + p["p0_b"][None, :, None])
    y0 = _gelu(y0)
    s_out = conv1x1(p["p1_w"], p["p1_b"], y0)

    y = s_out * v
    mu = y.mean(axis=(0, 2), keepdims=True)
    var = ((y - mu) ** 2).mean(axis=(0, 2), keepdims=True)
    yn = (y - mu) / jnp.sqrt(var + BN_EPS)
    y = p["bn_w"][None, :, None] * yn + p["bn_b"][None, :, None]
    y = _gelu(y)
    return conv1x1(p["pr_w"], p["pr_b"], y)


if __name__ == "__main__":
    root = jax.random.PRNGKey(0)
    pkey, xkey = jax.random.split(root)
    params = init_params(pkey)
    packed = pack_params(params, BATCH, SEQ)   # one-time parameter fusion / packing
    x = jax.random.normal(xkey, (BATCH, DIM, SEQ), jnp.float32)

    fwd = jax.jit(attention_forward)
    out = jax.block_until_ready(fwd(x, packed))

    ref = reference_forward(x, params)
    assert out.shape == (BATCH, DIM, SEQ)
    max_err = float(jnp.max(jnp.abs(out - ref)))
    assert max_err < 2e-3, f"kernel/reference mismatch: max |diff| = {max_err}"
    print("KERNEL_OK")
</pallas_src>

<mosaic_0001>
module attributes {stable_mosaic.version = 11 : i64} {
  func.func @_attention_kernel(%arg0: memref<32x128xf32, #tpu.memory_space<vmem>>, %arg1: memref<648x128xf32, #tpu.memory_space<vmem>>, %arg2: memref<64x32xf32, #tpu.memory_space<vmem>>, %arg3: memref<32x5xf32, #tpu.memory_space<vmem>>, %arg4: memref<32x8xf32, #tpu.memory_space<vmem>>, %arg5: memref<64x32xf32, #tpu.memory_space<vmem>>, %arg6: memref<32x64xf32, #tpu.memory_space<vmem>>, %arg7: memref<32x32xf32, #tpu.memory_space<vmem>>, %arg8: memref<64x8xf32, #tpu.memory_space<vmem>>, %arg9: memref<32x128xf32, #tpu.memory_space<vmem>>) attributes {dimension_semantics = [], scalar_prefetch = 0 : i64, scratch_operands = 0 : i64, tpu.core_type = #tpu.core_type<tc>} {
    %c0 = arith.constant 0 : index
    %c0_0 = arith.constant 0 : index
    %0 = vector.load %arg0[%c0, %c0_0] : memref<32x128xf32, #tpu.memory_space<vmem>>, vector<32x128xf32>
    %c0_1 = arith.constant 0 : index
    %c0_2 = arith.constant 0 : index
    %1 = vector.load %arg8[%c0_1, %c0_2] : memref<64x8xf32, #tpu.memory_space<vmem>>, vector<64x8xf32>
    %2 = vector.extract_strided_slice %1 {offsets = [0, 0], sizes = [32, 1], strides = [1, 1]} : vector<64x8xf32> to vector<32x1xf32>
    %3 = vector.extract_strided_slice %1 {offsets = [0, 1], sizes = [32, 1], strides = [1, 1]} : vector<64x8xf32> to vector<32x1xf32>
    %4 = vector.extract_strided_slice %1 {offsets = [0, 2], sizes = [32, 1], strides = [1, 1]} : vector<64x8xf32> to vector<32x1xf32>
    %5 = vector.extract_strided_slice %1 {offsets = [0, 3], sizes = [64, 1], strides = [1, 1]} : vector<64x8xf32> to vector<64x1xf32>
    %6 = vector.extract_strided_slice %1 {offsets = [0, 4], sizes = [32, 1], strides = [1, 1]} : vector<64x8xf32> to vector<32x1xf32>
    %7 = vector.extract_strided_slice %1 {offsets = [0, 5], sizes = [32, 1], strides = [1, 1]} : vector<64x8xf32> to vector<32x1xf32>
    %8 = vector.extract_strided_slice %1 {offsets = [0, 6], sizes = [32, 1], strides = [1, 1]} : vector<64x8xf32> to vector<32x1xf32>
    %9 = vector.extract_strided_slice %1 {offsets = [0, 7], sizes = [32, 1], strides = [1, 1]} : vector<64x8xf32> to vector<32x1xf32>
    %cst = arith.constant dense<0.000000e+00> : vector<128xf32>
    %10 = vector.multi_reduction <add>, %0, %cst [0] : vector<32x128xf32> to vector<128xf32>
    %11 = vector.shape_cast %10 : vector<128xf32> to vector<1x128xf32>
    %cst_3 = arith.constant 3.200000e+01 : f32
    %12 = vector.broadcast %cst_3 : f32 to vector<1x128xf32>
    %13 = arith.divf %11, %12 : vector<1x128xf32>
    %14 = vector.broadcast %13 : vector<1x128xf32> to vector<32x128xf32>
    %15 = arith.subf %0, %14 : vector<32x128xf32>
    %16 = arith.mulf %15, %15 : vector<32x128xf32>
    %cst_4 = arith.constant dense<0.000000e+00> : vector<128xf32>
    %17 = vector.multi_reduction <add>, %16, %cst_4 [0] : vector<32x128xf32> to vector<128xf32>
    %18 = vector.shape_cast %17 : vector<128xf32> to vector<1x128xf32>
    %cst_5 = arith.constant 3.200000e+01 : f32
    %19 = vector.broadcast %cst_5 : f32 to vector<1x128xf32>
    %20 = arith.divf %18, %19 : vector<1x128xf32>
    %cst_6 = arith.constant 9.99999997E-7 : f32
    %21 = vector.broadcast %cst_6 : f32 to vector<1x128xf32>
    %22 = arith.addf %20, %21 : vector<1x128xf32>
    %23 = math.rsqrt %22 : vector<1x128xf32>
    %24 = vector.broadcast %23 : vector<1x128xf32> to vector<32x128xf32>
    %25 = arith.mulf %15, %24 : vector<32x128xf32>
    %26 = vector.broadcast %2 : vector<32x1xf32> to vector<32x128xf32>
    %27 = arith.mulf %26, %25 : vector<32x128xf32>
    %28 = vector.broadcast %3 : vector<32x1xf32> to vector<32x128xf32>
    %29 = arith.addf %27, %28 : vector<32x128xf32>
    %cst_7 = arith.constant 5.000000e-01 : f32
    %30 = vector.broadcast %cst_7 : f32 to vector<32x128xf32>
    %31 = arith.mulf %30, %29 : vector<32x128xf32>
    %cst_8 = arith.constant 1.41421354 : f32
    %32 = vector.broadcast %cst_8 : f32 to vector<32x128xf32>
    %33 = arith.divf %29, %32 : vector<32x128xf32>
    %34 = math.erf %33 : vector<32x128xf32>
    %cst_9 = arith.constant 1.000000e+00 : f32
    %35 = vector.broadcast %cst_9 : f32 to vector<32x128xf32>
    %36 = arith.addf %35, %34 : vector<32x128xf32>
    %37 = arith.mulf %31, %36 : vector<32x128xf32>
    %c0_10 = arith.constant 0 : index
    %c0_11 = arith.constant 0 : index
    %38 = vector.load %arg2[%c0_10, %c0_11] : memref<64x32xf32, #tpu.memory_space<vmem>>, vector<64x32xf32>
    %cst_12 = arith.constant dense<0.000000e+00> : vector<64x128xf32>
    %39 = tpu.matmul %38, %37, %cst_12 {dimension_numbers = #tpu.dot_dimension_numbers<[1], [0], [0], [1], [0, 0, 1, 1], [], []>} : vector<64x32xf32>, vector<32x128xf32>, vector<64x128xf32> -> vector<64x128xf32>
    %40 = vector.extract_strided_slice %39 {offsets = [0, 0], sizes = [32, 128], strides = [1, 1]} : vector<64x128xf32> to vector<32x128xf32>
    %41 = vector.broadcast %4 : vector<32x1xf32> to vector<32x128xf32>
    %42 = arith.addf %40, %41 : vector<32x128xf32>
    %43 = vector.extract_strided_slice %39 {offsets = [32, 0], sizes = [32, 128], strides = [1, 1]} : vector<64x128xf32> to vector<32x128xf32>
    %c0_13 = arith.constant 0 : index
    %c0_14 = arith.constant 0 : index
    %44 = vector.load %arg3[%c0_13, %c0_14] : memref<32x5xf32, #tpu.memory_space<vmem>>, vector<32x5xf32>
    %45 = vector.extract_strided_slice %44 {offsets = [0, 0], sizes = [32, 1], strides = [1, 1]} : vector<32x5xf32> to vector<32x1xf32>
    %46 = vector.broadcast %45 : vector<32x1xf32> to vector<32x128xf32>
    %47 = arith.mulf %46, %43 : vector<32x128xf32>
    %48 = vector.extract_strided_slice %44 {offsets = [0, 1], sizes = [32, 1], strides = [1, 1]} : vector<32x5xf32> to vector<32x1xf32>
    %49 = vector.broadcast %48 : vector<32x1xf32> to vector<32x128xf32>
    %50 = arith.mulf %49, %43 : vector<32x128xf32>
    %51 = vector.extract_strided_slice %44 {offsets = [0, 2], sizes = [32, 1], strides = [1, 1]} : vector<32x5xf32> to vector<32x1xf32>
    %52 = vector.broadcast %51 : vector<32x1xf32> to vector<32x128xf32>
    %53 = arith.mulf %52, %43 : vector<32x128xf32>
    %54 = vector.extract_strided_slice %44 {offsets = [0, 3], sizes = [32, 1], strides = [1, 1]} : vector<32x5xf32> to vector<32x1xf32>
    %55 = vector.broadcast %54 : vector<32x1xf32> to vector<32x128xf32>
    %56 = arith.mulf %55, %43 : vector<32x128xf32>
    %57 = vector.extract_strided_slice %44 {offsets = [0, 4], sizes = [32, 1], strides = [1, 1]} : vector<32x5xf32> to vector<32x1xf32>
    %58 = vector.broadcast %57 : vector<32x1xf32> to vector<32x128xf32>
    %59 = arith.mulf %58, %43 : vector<32x128xf32>
    %c0_15 = arith.constant 0 : index
    %c0_16 = arith.constant 0 : index
    %60 = vector.load %arg4[%c0_15, %c0_16] : memref<32x8xf32, #tpu.memory_space<vmem>>, vector<32x8xf32>
    %61 = tpu.concatenate %47, %50, %53, %56, %59, %60 in 1 : vector<32x128xf32>, vector<32x128xf32>, vector<32x128xf32>, vector<32x128xf32>, vector<32x128xf32>, vector<32x8xf32> -> vector<32x648xf32>
    %c0_17 = arith.constant 0 : index
    %c0_18 = arith.constant 0 : index
    %62 = vector.load %arg1[%c0_17, %c0_18] : memref<648x128xf32, #tpu.memory_space<vmem>>, vector<648x128xf32>
    %cst_19 = arith.constant dense<0.000000e+00> : vector<32x128xf32>
    %63 = tpu.matmul %61, %62, %cst_19 {dimension_numbers = #tpu.dot_dimension_numbers<[1], [0], [0], [1], [0, 0, 1, 1], [], []>} : vector<32x648xf32>, vector<648x128xf32>, vector<32x128xf32> -> vector<32x128xf32>
    %c0_20 = arith.constant 0 : index
    %c0_21 = arith.constant 0 : index
    %64 = vector.load %arg5[%c0_20, %c0_21] : memref<64x32xf32, #tpu.memory_space<vmem>>, vector<64x32xf32>
    %cst_22 = arith.constant dense<0.000000e+00> : vector<64x128xf32>
    %65 = tpu.matmul %64, %63, %cst_22 {dimension_numbers = #tpu.dot_dimension_numbers<[1], [0], [0], [1], [0, 0, 1, 1], [], []>} : vector<64x32xf32>, vector<32x128xf32>, vector<64x128xf32> -> vector<64x128xf32>
    %66 = vector.broadcast %5 : vector<64x1xf32> to vector<64x128xf32>
    %67 = arith.addf %65, %66 : vector<64x128xf32>
    %cst_23 = arith.constant 5.000000e-01 : f32
    %68 = vector.broadcast %cst_23 : f32 to vector<64x128xf32>
    %69 = arith.mulf %68, %67 : vector<64x128xf32>
    %cst_24 = arith.constant 1.41421354 : f32
    %70 = vector.broadcast %cst_24 : f32 to vector<64x128xf32>
    %71 = arith.divf %67, %70 : vector<64x128xf32>
    %72 = math.erf %71 : vector<64x128xf32>
    %cst_25 = arith.constant 1.000000e+00 : f32
    %73 = vector.broadcast %cst_25 : f32 to vector<64x128xf32>
    %74 = arith.addf %73, %72 : vector<64x128xf32>
    %75 = arith.mulf %69, %74 : vector<64x128xf32>
    %c0_26 = arith.constant 0 : index
    %c0_27 = arith.constant 0 : index
    %76 = vector.load %arg6[%c0_26, %c0_27] : memref<32x64xf32, #tpu.memory_space<vmem>>, vector<32x64xf32>
    %cst_28 = arith.constant dense<0.000000e+00> : vector<32x128xf32>
    %77 = tpu.matmul %76, %75, %cst_28 {dimension_numbers = #tpu.dot_dimension_numbers<[1], [0], [0], [1], [0, 0, 1, 1], [], []>} : vector<32x64xf32>, vector<64x128xf32>, vector<32x128xf32> -> vector<32x128xf32>
    %78 = vector.broadcast %6 : vector<32x1xf32> to vector<32x128xf32>
    %79 = arith.addf %77, %78 : vector<32x128xf32>
    %80 = arith.mulf %79, %42 : vector<32x128xf32>
    %cst_29 = arith.constant dense<0.000000e+00> : vector<32xf32>
    %81 = vector.multi_reduction <add>, %80, %cst_29 [1] : vector<32x128xf32> to vector<32xf32>
    %82 = vector.shape_cast %81 : vector<32xf32> to vector<32x1xf32>
    %cst_30 = arith.constant 1.280000e+02 : f32
    %83 = vector.broadcast %cst_30 : f32 to vector<32x1xf32>
    %84 = arith.divf %82, %83 : vector<32x1xf32>
    %85 = vector.broadcast %84 : vector<32x1xf32> to vector<32x128xf32>
    %86 = arith.subf %80, %85 : vector<32x128xf32>
    %87 = arith.mulf %86, %86 : vector<32x128xf32>
    %cst_31 = arith.constant dense<0.000000e+00> : vector<32xf32>
    %88 = vector.multi_reduction <add>, %87, %cst_31 [1] : vector<32x128xf32> to vector<32xf32>
    %89 = vector.shape_cast %88 : vector<32xf32> to vector<32x1xf32>
    %cst_32 = arith.constant 1.280000e+02 : f32
    %90 = vector.broadcast %cst_32 : f32 to vector<32x1xf32>
    %91 = arith.divf %89, %90 : vector<32x1xf32>
    %cst_33 = arith.constant 9.99999974E-6 : f32
    %92 = vector.broadcast %cst_33 : f32 to vector<32x1xf32>
    %93 = arith.addf %91, %92 : vector<32x1xf32>
    %94 = math.rsqrt %93 : vector<32x1xf32>
    %95 = vector.broadcast %94 : vector<32x1xf32> to vector<32x128xf32>
    %96 = arith.mulf %86, %95 : vector<32x128xf32>
    %97 = vector.broadcast %7 : vector<32x1xf32> to vector<32x128xf32>
    %98 = arith.mulf %97, %96 : vector<32x128xf32>
    %99 = vector.broadcast %8 : vector<32x1xf32> to vector<32x128xf32>
    %100 = arith.addf %98, %99 : vector<32x128xf32>
    %cst_34 = arith.constant 5.000000e-01 : f32
    %101 = vector.broadcast %cst_34 : f32 to vector<32x128xf32>
    %102 = arith.mulf %101, %100 : vector<32x128xf32>
    %cst_35 = arith.constant 1.41421354 : f32
    %103 = vector.broadcast %cst_35 : f32 to vector<32x128xf32>
    %104 = arith.divf %100, %103 : vector<32x128xf32>
    %105 = math.erf %104 : vector<32x128xf32>
    %cst_36 = arith.constant 1.000000e+00 : f32
    %106 = vector.broadcast %cst_36 : f32 to vector<32x128xf32>
    %107 = arith.addf %106, %105 : vector<32x128xf32>
    %108 = arith.mulf %102, %107 : vector<32x128xf32>
    %c0_37 = arith.constant 0 : index
    %c0_38 = arith.constant 0 : index
    %109 = vector.load %arg7[%c0_37, %c0_38] : memref<32x32xf32, #tpu.memory_space<vmem>>, vector<32x32xf32>
    %cst_39 = arith.constant dense<0.000000e+00> : vector<32x128xf32>
    %110 = tpu.matmul %109, %108, %cst_39 {dimension_numbers = #tpu.dot_dimension_numbers<[1], [0], [0], [1], [0, 0, 1, 1], [], []>} : vector<32x32xf32>, vector<32x128xf32>, vector<32x128xf32> -> vector<32x128xf32>
    %111 = vector.broadcast %9 : vector<32x1xf32> to vector<32x128xf32>
    %112 = arith.addf %110, %111 : vector<32x128xf32>
    %c0_40 = arith.constant 0 : index
    %c0_41 = arith.constant 0 : index
    %113 = vector.load %arg9[%c0_40, %c0_41] : memref<32x128xf32, #tpu.memory_space<vmem>>, vector<32x128xf32>
    tpu.vector_store %arg9[%c0_40, %c0_41], %112 {strides = array<i32>} : memref<32x128xf32, #tpu.memory_space<vmem>>, vector<32x128xf32>,
    return
  }
}

</mosaic_0001>

<llo_original>
// kernel: attention_forward.1
$region0: #{attention_forward.1}
  #allocation0 [shape = 'u32[]', space=smem, size = 0x4, offset = 0x4, fixed_abs, tag = 'smem constant byte address 0x4 - core index']
  #allocation1 [shape = 'u32[144,128]{1,0:T(1,128)}', space=vmem, size = 0x12000, scoped, tag = 'internal scratch']
  %s0 = inlined_call_operand.vmem [shape: f32[32,128], index: 0, kind: input, shape index: {}]
  %s1 = inlined_call_operand.hbm [shape: f32[648,128], index: 1, kind: input, shape index: {}]
  %s2 = inlined_call_operand.vmem [shape: f32[64,32], index: 2, kind: input, shape index: {}]
  %s3 = inlined_call_operand.vmem [shape: f32[32,5], index: 3, kind: input, shape index: {}]
  %s4 = inlined_call_operand.vmem [shape: f32[32,8], index: 4, kind: input, shape index: {}]
  %s5 = inlined_call_operand.vmem [shape: f32[64,32], index: 5, kind: input, shape index: {}]
  %s6 = inlined_call_operand.vmem [shape: f32[32,64], index: 6, kind: input, shape index: {}]
  %s7 = inlined_call_operand.vmem [shape: f32[32,32], index: 7, kind: input, shape index: {}]
  %s8 = inlined_call_operand.vmem [shape: f32[64,8], index: 8, kind: input, shape index: {}]
  %s9 = inlined_call_operand.vmem [shape: f32[32,128], index: 9, kind: output, shape index: {}]
  %s10 = sld [smem:[#allocation0]]
  $region50: #{attention_forward.1} parent=0
    _
  %s12 = ssub.s32 1, %s10
  %s13 = scalar_select 0, %s12, %s10
  $region1: #{attention_forward.1} parent=0
    #allocation2 [shape = 'u8[331776]{0}', space=vmem, size = 0x51000, scoped, tag = 'input window, operand 1, single buffered']
    #allocation3 [shape = 's32[1]{0}', space=sflag, size = 0x4, scoped, tag = 'scoped memory for attention_forward.1']
    %14 = vsyncpa [#allocation3], 0
    // Predicated region
    $region2: #{attention_forward.1} parent=1 // pred_check
      _
    $region3: #{attention_forward.1} parent=1 // pred_check_branch
      %16 = sbr.rel (0) target = $region5
    $region4: #{attention_forward.1} parent=1 // pred_region
      _
    $region5: #{attention_forward.1} parent=1 // pred_fallthru
      _
    // Predicated region
    $region6: #{attention_forward.1} parent=1 // pred_check
      _
    $region7: #{attention_forward.1} parent=1 // pred_check_branch
      %18 = sbr.rel (0) target = $region9
    $region8: #{attention_forward.1} parent=1 // pred_region
      %s20 = ssub.s32 10368, 10368
      %21 = vsyncadd [#allocation3], %s20
      %s22 = sshll.u32 [#allocation2], 4
      %s23 = int_to_ptr.vmem [resolvable:$true] %s22
      %28 = dma.hbm_to_vmem [thread:$0]  %s1, 10368, %s23, [#allocation3], 128, 128, 8
    $region9: #{attention_forward.1} parent=1 // pred_fallthru
      _
    // Predicated region
    $region10: #{attention_forward.1} parent=1 // pred_check
      _
    $region11: #{attention_forward.1} parent=1 // pred_check_branch
      %30 = sbr.rel (0) target = $region13
    $region12: #{attention_forward.1} parent=1 // pred_region
      _
    $region13: #{attention_forward.1} parent=1 // pred_fallthru
      _
    // Predicated region
    $region14: #{attention_forward.1} parent=1 // pred_check
      _
    $region15: #{attention_forward.1} parent=1 // pred_check_branch
      %32 = sbr.rel (0) target = $region17
    $region16: #{attention_forward.1} parent=1 // pred_region
      _
    $region17: #{attention_forward.1} parent=1 // pred_fallthru
      _
    // Predicated region
    $region18: #{attention_forward.1} parent=1 // pred_check
      _
    $region19: #{attention_forward.1} parent=1 // pred_check_branch
      %34 = sbr.rel (0) target = $region21
    $region20: #{attention_forward.1} parent=1 // pred_region
      _
    $region21: #{attention_forward.1} parent=1 // pred_fallthru
      _
    // Predicated region
    $region22: #{attention_forward.1} parent=1 // pred_check
      _
    $region23: #{attention_forward.1} parent=1 // pred_check_branch
      %36 = sbr.rel (0) target = $region25
    $region24: #{attention_forward.1} parent=1 // pred_region
      _
    $region25: #{attention_forward.1} parent=1 // pred_fallthru
      _
    // Predicated region
    $region26: #{attention_forward.1} parent=1 // pred_check
      _
    $region27: #{attention_forward.1} parent=1 // pred_check_branch
      %38 = sbr.rel (0) target = $region29
    $region28: #{attention_forward.1} parent=1 // pred_region
      _
    $region29: #{attention_forward.1} parent=1 // pred_fallthru
      _
    // Predicated region
    $region30: #{attention_forward.1} parent=1 // pred_check
      _
    $region31: #{attention_forward.1} parent=1 // pred_check_branch
      %40 = sbr.rel (0) target = $region33
    $region32: #{attention_forward.1} parent=1 // pred_region
      _
    $region33: #{attention_forward.1} parent=1 // pred_fallthru
      _
    // Predicated region
    $region34: #{attention_forward.1} parent=1 // pred_check
      _
    $region35: #{attention_forward.1} parent=1 // pred_check_branch
      %42 = sbr.rel (0) target = $region37
    $region36: #{attention_forward.1} parent=1 // pred_region
      _
    $region37: #{attention_forward.1} parent=1 // pred_fallthru
      _
    // Predicated region
    $region38: #{attention_forward.1} parent=1 // pred_check
      _
    $region39: #{attention_forward.1} parent=1 // pred_check_branch
      %44 = sbr.rel (0) target = $region41
    $region40: #{attention_forward.1} parent=1 // pred_region
      %45 = dma.done [#allocation3], 10368
    $region41: #{attention_forward.1} parent=1 // pred_fallthru
      _
    %v46 = vld [vmem:[%s0] sm:$0xff]
    %v47 = vld [vmem:[%s0 + $0x8] sm:$0xff]
    %v48 = vld [vmem:[%s0 + $0x10] sm:$0xff]
    %v49 = vld [vmem:[%s0 + $0x18] sm:$0xff]
    %v50 = vld [vmem:[%s8] sm:$0xff]
    %v51 = vld [vmem:[%s8 + $0x8] sm:$0xff]
    %v52 = vld [vmem:[%s8 + $0x10] sm:$0xff]
    %v53 = vld [vmem:[%s8 + $0x18] sm:$0xff]
    %v54 = vld [vmem:[%s8 + $0x20] sm:$0xff]
    %v55 = vld [vmem:[%s8 + $0x28] sm:$0xff]
    %v56 = vld [vmem:[%s8 + $0x30] sm:$0xff]
    %v57 = vld [vmem:[%s8 + $0x38] sm:$0xff]
    %v58 = vadd.f32 %v46, %v47
    %v59 = vadd.f32 %v58, %v48
    %v60 = vadd.f32 %v59, %v49
    %v61 = vrot.slane %v60, 4
    %v62 = vadd.f32 %v60, %v61
    %v63 = vrot.slane %v62, 2
    %v64 = vadd.f32 %v62, %v63
    %v65 = vrot.slane %v64, 1
    %v66 = vadd.f32 %v64, %v65
    %v67 = vrcp.pop 32.0
    %v68 = vmul.f32 %v66, %v67
    %v69 = vsub.f32 %v46, %v68
    %v70 = vsub.f32 %v47, %v68
    %v71 = vsub.f32 %v48, %v68
    %v72 = vsub.f32 %v49, %v68
    %v73 = vmul.f32 %v69, %v69
    %v74 = vmul.f32 %v70, %v70
    %v75 = vmul.f32 %v71, %v71
    %v76 = vmul.f32 %v72, %v72
    %v77 = vadd.f32 %v73, %v74
    %v78 = vadd.f32 %v77, %v75
    %v79 = vadd.f32 %v78, %v76
    %v80 = vrot.slane %v79, 4
    %v81 = vadd.f32 %v79, %v80
    %v82 = vrot.slane %v81, 2
    %v83 = vadd.f32 %v81, %v82
    %v84 = vrot.slane %v83, 1
    %v85 = vadd.f32 %v83, %v84
    %v86 = vmul.f32 %v85, %v67
    %v87 = vadd.f32 %v86, 1e-06
    %v88 = vrsqrt.pop %v87
    %v89 = vmul.f32 %v69, %v88
    %v90 = vmul.f32 %v70, %v88
    %v91 = vmul.f32 %v71, %v88
    %v92 = vmul.f32 %v72, %v88
    %94 = vset.pattern.permute.xlu0 0
    %95 = vperm.xlu0 %94, %v50
    %v96 = vpop.permute.xlu0 %95
    %99 = vset.pattern.permute.xlu0 0
    %100 = vperm.xlu0 %99, %v51
    %v101 = vpop.permute.xlu0 %100
    %104 = vset.pattern.permute.xlu0 0
    %105 = vperm.xlu0 %104, %v52
    %v106 = vpop.permute.xlu0 %105
    %109 = vset.pattern.permute.xlu0 0
    %110 = vperm.xlu0 %109, %v53
    %v111 = vpop.permute.xlu0 %110
    %v113 = vmul.f32 %v96, %v89
    %v114 = vmul.f32 %v101, %v90
    %v115 = vmul.f32 %v106, %v91
    %v116 = vmul.f32 %v111, %v92
    %117 = vset.pattern.permute.xlu0 1
    %118 = vperm.xlu0 %117, %v50
    %v119 = vpop.permute.xlu0 %118
    %121 = vset.pattern.permute.xlu0 1
    %122 = vperm.xlu0 %121, %v51
    %v123 = vpop.permute.xlu0 %122
    %125 = vset.pattern.permute.xlu0 1
    %126 = vperm.xlu0 %125, %v52
    %v127 = vpop.permute.xlu0 %126
    %129 = vset.pattern.permute.xlu0 1
    %130 = vperm.xlu0 %129, %v53
    %v131 = vpop.permute.xlu0 %130
    %v133 = vadd.f32 %v113, %v119
    %v134 = vadd.f32 %v114, %v123
    %v135 = vadd.f32 %v115, %v127
    %v136 = vadd.f32 %v116, %v131
    %v137 = vmul.f32 %v133, 0.5
    %v138 = vmul.f32 %v134, 0.5
    %v139 = vmul.f32 %v135, 0.5
    %v140 = vmul.f32 %v136, 0.5
    %v141 = vrcp.pop 1.4142135
    %v142 = vmul.f32 %v133, %v141
    %v143 = vmul.f32 %v134, %v141
    %v144 = vmul.f32 %v135, %v141
    %v145 = vmul.f32 %v136, %v141
    %v146 = verf.f32.pop %v142
    %v147 = verf.f32.pop %v143
    %v148 = verf.f32.pop %v144
    %v149 = verf.f32.pop %v145
    %v150 = vadd.f32 %v146, 1.0
    %v151 = vadd.f32 %v147, 1.0
    %v152 = vadd.f32 %v148, 1.0
    %v153 = vadd.f32 %v149, 1.0
    %v154 = vmul.f32 %v137, %v150
    %v155 = vmul.f32 %v138, %v151
    %v156 = vmul.f32 %v139, %v152
    %v157 = vmul.f32 %v140, %v153
    %v158 = vld [vmem:[%s2] sm:$0xff]
    %v159 = vld [vmem:[%s2 + $0x8] sm:$0xff]
    %v160 = vld [vmem:[%s2 + $0x10] sm:$0xff]
    %v161 = vld [vmem:[%s2 + $0x18] sm:$0xff]
    %v162 = vld [vmem:[%s2 + $0x20] sm:$0xff]
    %v163 = vld [vmem:[%s2 + $0x28] sm:$0xff]
    %v164 = vld [vmem:[%s2 + $0x30] sm:$0xff]
    %v165 = vld [vmem:[%s2 + $0x38] sm:$0xff]
    %vm166 = vcmask 261120
    %v168 = vsel %vm166, %v158, 0
    %v171 = vsel %vm166, %v159, 0
    %v174 = vsel %vm166, %v160, 0
    %v177 = vsel %vm166, %v161, 0
    %v180 = vsel %vm166, %v162, 0
    %v183 = vsel %vm166, %v163, 0
    %v186 = vsel %vm166, %v164, 0
    %v189 = vsel %vm166, %v165, 0
    %191 = vmatprep.subr.mxu0 0.0
    %192 = vmatpush1.msra.mxu0 0.0
    %193 = vmatprep.subr.mxu0 0.0
    %194 = vmatpush1.msra.mxu0 0.0
    %195 = vmatprep.subr.mxu0 0.0
    %196 = vmatpush1.msra.mxu0 0.0
    %197 = vmatprep.subr.mxu0 0.0
    %198 = vmatpush1.msra.mxu0 0.0
    %199 = vmatprep.subr.mxu0 0.0
    %200 = vmatpush1.msra.mxu0 0.0
    %201 = vmatprep.subr.mxu0 0.0
    %202 = vmatpush1.msra.mxu0 0.0
    %203 = vmatprep.subr.mxu0 0.0
    %204 = vmatpush1.msra.mxu0 0.0
    %205 = vmatprep.subr.mxu0 0.0
    %206 = vmatpush1.msra.mxu0 0.0
    %207 = vmatprep.subr.mxu0 0.0
    %208 = vmatpush1.msra.mxu0 0.0
    %209 = vmatprep.subr.mxu0 0.0
    %210 = vmatpush1.msra.mxu0 0.0
    %211 = vmatprep.subr.mxu0 0.0
    %212 = vmatpush1.msra.mxu0 0.0
    %213 = vmatprep.subr.mxu0 0.0
    %214 = vmatpush1.msra.mxu0 0.0
    %215 = vmatprep.subr.mxu0 0.0
    %216 = vmatpush1.msra.mxu0 %v157
    %217 = vmatprep.subr.mxu0 0.0
    %218 = vmatpush1.msra.mxu0 %v156
    %219 = vmatprep.subr.mxu0 0.0
    %220 = vmatpush1.msra.mxu0 %v155
    %221 = vmatprep.subr.mxu0 0.0
    %222 = vmatpush1.msra.mxu0 %v154
    %223 = vmatprep.subr.mxu0 0.0
    %224 = vmatpush2.msra.mxu0 0.0
    %225 = vmatprep.subr.mxu0 0.0
    %226 = vmatpush2.msra.mxu0 0.0
    %227 = vmatprep.subr.mxu0 0.0
    %228 = vmatpush2.msra.mxu0 0.0
    %229 = vmatprep.subr.mxu0 0.0
    %230 = vmatpush2.msra.mxu0 0.0
    %231 = vmatprep.subr.mxu0 0.0
    %232 = vmatpush2.msra.mxu0 0.0
    %233 = vmatprep.subr.mxu0 0.0
    %234 = vmatpush2.msra.mxu0 0.0
    %235 = vmatprep.subr.mxu0 0.0
    %236 = vmatpush2.msra.mxu0 0.0
    %237 = vmatprep.subr.mxu0 0.0
    %238 = vmatpush2.msra.mxu0 0.0
    %239 = vmatprep.subr.mxu0 0.0
    %240 = vmatpush2.msra.mxu0 0.0
    %241 = vmatprep.subr.mxu0 0.0
    %242 = vmatpush2.msra.mxu0 0.0
    %243 = vmatprep.subr.mxu0 0.0
    %244 = vmatpush2.msra.mxu0 0.0
    %245 = vmatprep.subr.mxu0 0.0
    %246 = vmatpush2.msra.mxu0 0.0
    %247 = vmatprep.subr.mxu0 0.0
    %248 = vmatpush2.msra.mxu0 0.0
    %249 = vmatprep.subr.mxu0 0.0
    %250 = vmatpush2.msra.mxu0 0.0
    %251 = vmatprep.subr.mxu0 0.0
    %252 = vmatpush2.msra.mxu0 0.0
    %253 = vmatprep.subr.mxu0 0.0
    %254 = vmatpush2.msra.mxu0 0.0
    %255 = vmatprep.mubr.f32.mxu0 0.0
    %256 = vmatmul.mubr.f32.gmra.mxu0 %v168
    %v257 = vpop.f32.mrf.mxu0
    %v258 = vadd.f32 0.0, %v257
    %v259 = vpop.f32.mrf.mxu0
    %260 = vmatprep.mubr.f32.mxu0 0.0
    %261 = vmatmul.mubr.f32.gmra.mxu0 %v171
    %v262 = vpop.f32.mrf.mxu0
    %v263 = vadd.f32 0.0, %v262
    %v264 = vpop.f32.mrf.mxu0
    %265 = vmatprep.mubr.f32.mxu0 0.0
    %266 = vmatmul.mubr.f32.gmra.mxu0 %v174
    %v267 = vpop.f32.mrf.mxu0
    %v268 = vadd.f32 0.0, %v267
    %v269 = vpop.f32.mrf.mxu0
    %270 = vmatprep.mubr.f32.mxu0 0.0
    %271 = vmatmul.mubr.f32.gmra.mxu0 %v177
    %v272 = vpop.f32.mrf.mxu0
    %v273 = vadd.f32 0.0, %v272
    %v274 = vpop.f32.mrf.mxu0
    %275 = vmatprep.mubr.f32.mxu0 0.0
    %276 = vmatmul.mubr.f32.gmra.mxu0 %v180
    %v277 = vpop.f32.mrf.mxu0
    %v278 = vadd.f32 0.0, %v277
    %v279 = vpop.f32.mrf.mxu0
    %280 = vmatprep.mubr.f32.mxu0 0.0
    %281 = vmatmul.mubr.f32.gmra.mxu0 %v183
    %v282 = vpop.f32.mrf.mxu0
    %v283 = vadd.f32 0.0, %v282
    %v284 = vpop.f32.mrf.mxu0
    %285 = vmatprep.mubr.f32.mxu0 0.0
    %286 = vmatmul.mubr.f32.gmra.mxu0 %v186
    %v287 = vpop.f32.mrf.mxu0
    %v288 = vadd.f32 0.0, %v287
    %v289 = vpop.f32.mrf.mxu0
    %290 = vmatprep.mubr.f32.mxu0 0.0
    %291 = vmatmul.mubr.f32.gmra.mxu0 %v189
    %v292 = vpop.f32.mrf.mxu0
    %v293 = vadd.f32 0.0, %v292
    %v294 = vpop.f32.mrf.mxu0
    %295 = vdwg.mxu0
    %296 = vset.pattern.permute.xlu0 2
    %297 = vperm.xlu0 %296, %v50
    %v298 = vpop.permute.xlu0 %297
    %300 = vset.pattern.permute.xlu0 2
    %301 = vperm.xlu0 %300, %v51
    %v302 = vpop.permute.xlu0 %301
    %304 = vset.pattern.permute.xlu0 2
    %305 = vperm.xlu0 %304, %v52
    %v306 = vpop.permute.xlu0 %305
    %308 = vset.pattern.permute.xlu0 2
    %309 = vperm.xlu0 %308, %v53
    %v310 = vpop.permute.xlu0 %309
    %v312 = vadd.f32 %v258, %v298
    %v313 = vadd.f32 %v263, %v302
    %v314 = vadd.f32 %v268, %v306
    %v315 = vadd.f32 %v273, %v310
    %v316 = vld [vmem:[%s3] sm:$0xff]
    %v317 = vld [vmem:[%s3 + $0x8] sm:$0xff]
    %v318 = vld [vmem:[%s3 + $0x10] sm:$0xff]
    %v319 = vld [vmem:[%s3 + $0x18] sm:$0xff]
    %321 = vset.pattern.permute.xlu0 0
    %322 = vperm.xlu0 %321, %v316
    %v323 = vpop.permute.xlu0 %322
    %326 = vset.pattern.permute.xlu0 0
    %327 = vperm.xlu0 %326, %v317
    %v328 = vpop.permute.xlu0 %327
    %331 = vset.pattern.permute.xlu0 0
    %332 = vperm.xlu0 %331, %v318
    %v333 = vpop.permute.xlu0 %332
    %336 = vset.pattern.permute.xlu0 0
    %337 = vperm.xlu0 %336, %v319
    %v338 = vpop.permute.xlu0 %337
    %v340 = vmul.f32 %v323, %v278
    %v341 = vmul.f32 %v328, %v283
    %v342 = vmul.f32 %v333, %v288
    %v343 = vmul.f32 %v338, %v293
    %344 = vset.pattern.permute.xlu0 1
    %345 = vperm.xlu0 %344, %v316
    %v346 = vpop.permute.xlu0 %345
    %348 = vset.pattern.permute.xlu0 1
    %349 = vperm.xlu0 %348, %v317
    %v350 = vpop.permute.xlu0 %349
    %352 = vset.pattern.permute.xlu0 1
    %353 = vperm.xlu0 %352, %v318
    %v354 = vpop.permute.xlu0 %353
    %356 = vset.pattern.permute.xlu0 1
    %357 = vperm.xlu0 %356, %v319
    %v358 = vpop.permute.xlu0 %357
    %v360 = vmul.f32 %v346, %v278
    %v361 = vmul.f32 %v350, %v283
    %v362 = vmul.f32 %v354, %v288
    %v363 = vmul.f32 %v358, %v293
    %364 = vset.pattern.permute.xlu0 2
    %365 = vperm.xlu0 %364, %v316
    %v366 = vpop.permute.xlu0 %365
    %368 = vset.pattern.permute.xlu0 2
    %369 = vperm.xlu0 %368, %v317
    %v370 = vpop.permute.xlu0 %369
    %372 = vset.pattern.permute.xlu0 2
    %373 = vperm.xlu0 %372, %v318
    %v374 = vpop.permute.xlu0 %373
    %376 = vset.pattern.permute.xlu0 2
    %377 = vperm.xlu0 %376, %v319
    %v378 = vpop.permute.xlu0 %377
    %v380 = vmul.f32 %v366, %v278
    %v381 = vmul.f32 %v370, %v283
    %v382 = vmul.f32 %v374, %v288
    %v383 = vmul.f32 %v378, %v293
    %384 = vset.pattern.permute.xlu0 3
    %385 = vperm.xlu0 %384, %v316
    %v386 = vpop.permute.xlu0 %385
    %388 = vset.pattern.permute.xlu0 3
    %389 = vperm.xlu0 %388, %v317
    %v390 = vpop.permute.xlu0 %389
    %392 = vset.pattern.permute.xlu0 3
    %393 = vperm.xlu0 %392, %v318
    %v394 = vpop.permute.xlu0 %393
    %396 = vset.pattern.permute.xlu0 3
    %397 = vperm.xlu0 %396, %v319
    %v398 = vpop.permute.xlu0 %397
    %v400 = vmul.f32 %v386, %v278
    %v401 = vmul.f32 %v390, %v283
    %v402 = vmul.f32 %v394, %v288
    %v403 = vmul.f32 %v398, %v293
    %404 = vset.pattern.permute.xlu0 4
    %405 = vperm.xlu0 %404, %v316
    %v406 = vpop.permute.xlu0 %405
    %408 = vset.pattern.permute.xlu0 4
    %409 = vperm.xlu0 %408, %v317
    %v410 = vpop.permute.xlu0 %409
    %412 = vset.pattern.permute.xlu0 4
    %413 = vperm.xlu0 %412, %v318
    %v414 = vpop.permute.xlu0 %413
    %416 = vset.pattern.permute.xlu0 4
    %417 = vperm.xlu0 %416, %v319
    %v418 = vpop.permute.xlu0 %417
    %v420 = vmul.f32 %v406, %v278
    %v421 = vmul.f32 %v410, %v283
    %v422 = vmul.f32 %v414, %v288
    %v423 = vmul.f32 %v418, %v293
    %v424 = vld [vmem:[%s4] sm:$0xff]
    %v425 = vld [vmem:[%s4 + $0x8] sm:$0xff]
    %v426 = vld [vmem:[%s4 + $0x10] sm:$0xff]
    %v427 = vld [vmem:[%s4 + $0x18] sm:$0xff]
    %v428 = vld [vmem:[#allocation2] sm:$0xff]
    %v429 = vld [vmem:[#allocation2 + $0x8] sm:$0xff]
    %v430 = vld [vmem:[#allocation2 + $0x10] sm:$0xff]
    %v431 = vld [vmem:[#allocation2 + $0x18] sm:$0xff]
    %v432 = vld [vmem:[#allocation2 + $0x20] sm:$0xff]
    %v433 = vld [vmem:[#allocation2 + $0x28] sm:$0xff]
    %v434 = vld [vmem:[#allocation2 + $0x30] sm:$0xff]
    %v435 = vld [vmem:[#allocation2 + $0x38] sm:$0xff]
    %v436 = vld [vmem:[#allocation2 + $0x40] sm:$0xff]
    %v437 = vld [vmem:[#allocation2 + $0x48] sm:$0xff]
    %v438 = vld [vmem:[#allocation2 + $0x50] sm:$0xff]
    %v439 = vld [vmem:[#allocation2 + $0x58] sm:$0xff]
    %v440 = vld [vmem:[#allocation2 + $0x60] sm:$0xff]
    %v441 = vld [vmem:[#allocation2 + $0x68] sm:$0xff]
    %v442 = vld [vmem:[#allocation2 + $0x70] sm:$0xff]
    %v443 = vld [vmem:[#allocation2 + $0x78] sm:$0xff]
    %v444 = vld [vmem:[#allocation2 + $0x80] sm:$0xff]
    %v445 = vld [vmem:[#allocation2 + $0x88] sm:$0xff]
    %v446 = vld [vmem:[#allocation2 + $0x90] sm:$0xff]
    %v447 = vld [vmem:[#allocation2 + $0x98] sm:$0xff]
    %v448 = vld [vmem:[#allocation2 + $0xa0] sm:$0xff]
    %v449 = vld [vmem:[#allocation2 + $0xa8] sm:$0xff]
    %v450 = vld [vmem:[#allocation2 + $0xb0] sm:$0xff]
    %v451 = vld [vmem:[#allocation2 + $0xb8] sm:$0xff]
    %v452 = vld [vmem:[#allocation2 + $0xc0] sm:$0xff]
    %v453 = vld [vmem:[#allocation2 + $0xc8] sm:$0xff]
    %v454 = vld [vmem:[#allocation2 + $0xd0] sm:$0xff]
    %v455 = vld [vmem:[#allocation2 + $0xd8] sm:$0xff]
    %v456 = vld [vmem:[#allocation2 + $0xe0] sm:$0xff]
    %v457 = vld [vmem:[#allocation2 + $0xe8] sm:$0xff]
    %v458 = vld [vmem:[#allocation2 + $0xf0] sm:$0xff]
    %v459 = vld [vmem:[#allocation2 + $0xf8] sm:$0xff]
    %v460 = vld [vmem:[#allocation2 + $0x100] sm:$0xff]
    %v461 = vld [vmem:[#allocation2 + $0x108] sm:$0xff]
    %v462 = vld [vmem:[#allocation2 + $0x110] sm:$0xff]
    %v463 = vld [vmem:[#allocation2 + $0x118] sm:$0xff]
    %v464 = vld [vmem:[#allocation2 + $0x120] sm:$0xff]
    %v465 = vld [vmem:[#allocation2 + $0x128] sm:$0xff]
    %v466 = vld [vmem:[#allocation2 + $0x130] sm:$0xff]
    %v467 = vld [vmem:[#allocation2 + $0x138] sm:$0xff]
    %v468 = vld [vmem:[#allocation2 + $0x140] sm:$0xff]
    %v469 = vld [vmem:[#allocation2 + $0x148] sm:$0xff]
    %v470 = vld [vmem:[#allocation2 + $0x150] sm:$0xff]
    %v471 = vld [vmem:[#allocation2 + $0x158] sm:$0xff]
    %v472 = vld [vmem:[#allocation2 + $0x160] sm:$0xff]
    %v473 = vld [vmem:[#allocation2 + $0x168] sm:$0xff]
    %v474 = vld [vmem:[#allocation2 + $0x170] sm:$0xff]
    %v475 = vld [vmem:[#allocation2 + $0x178] sm:$0xff]
    %v476 = vld [vmem:[#allocation2 + $0x180] sm:$0xff]
    %v477 = vld [vmem:[#allocation2 + $0x188] sm:$0xff]
    %v478 = vld [vmem:[#allocation2 + $0x190] sm:$0xff]
    %v479 = vld [vmem:[#allocation2 + $0x198] sm:$0xff]
    %v480 = vld [vmem:[#allocation2 + $0x1a0] sm:$0xff]
    %v481 = vld [vmem:[#allocation2 + $0x1a8] sm:$0xff]
    %v482 = vld [vmem:[#allocation2 + $0x1b0] sm:$0xff]
    %v483 = vld [vmem:[#allocation2 + $0x1b8] sm:$0xff]
    %v484 = vld [vmem:[#allocation2 + $0x1c0] sm:$0xff]
    %v485 = vld [vmem:[#allocation2 + $0x1c8] sm:$0xff]
    %v486 = vld [vmem:[#allocation2 + $0x1d0] sm:$0xff]
    %v487 = vld [vmem:[#allocation2 + $0x1d8] sm:$0xff]
    %v488 = vld [vmem:[#allocation2 + $0x1e0] sm:$0xff]
    %v489 = vld [vmem:[#allocation2 + $0x1e8] sm:$0xff]
    %v490 = vld [vmem:[#allocation2 + $0x1f0] sm:$0xff]
    %v491 = vld [vmem:[#allocation2 + $0x1f8] sm:$0xff]
    %v492 = vld [vmem:[#allocation2 + $0x200] sm:$0xff]
    %v493 = vld [vmem:[#allocation2 + $0x208] sm:$0xff]
    %v494 = vld [vmem:[#allocation2 + $0x210] sm:$0xff]
    %v495 = vld [vmem:[#allocation2 + $0x218] sm:$0xff]
    %v496 = vld [vmem:[#allocation2 + $0x220] sm:$0xff]
    %v497 = vld [vmem:[#allocation2 + $0x228] sm:$0xff]
    %v498 = vld [vmem:[#allocation2 + $0x230] sm:$0xff]
    %v499 = vld [vmem:[#allocation2 + $0x238] sm:$0xff]
    %v500 = vld [vmem:[#allocation2 + $0x240] sm:$0xff]
    %v501 = vld [vmem:[#allocation2 + $0x248] sm:$0xff]
    %v502 = vld [vmem:[#allocation2 + $0x250] sm:$0xff]
    %v503 = vld [vmem:[#allocation2 + $0x258] sm:$0xff]
    %v504 = vld [vmem:[#allocation2 + $0x260] sm:$0xff]
    %v505 = vld [vmem:[#allocation2 + $0x268] sm:$0xff]
    %v506 = vld [vmem:[#allocation2 + $0x270] sm:$0xff]
    %v507 = vld [vmem:[#allocation2 + $0x278] sm:$0xff]
    %v508 = vld [vmem:[#allocation2 + $0x280] sm:$0xff]
    %vm509 = vcmask 64512
    %v511 = vsel %vm509, %v424, 0
    %v514 = vsel %vm509, %v425, 0
    %v517 = vsel %vm509, %v426, 0
    %v520 = vsel %vm509, %v427, 0
    %522 = vmatprep.subr.mxu0 0.0
    %523 = vmatpush1.msra.mxu0 %v443
    %524 = vmatprep.subr.mxu0 0.0
    %525 = vmatpush1.msra.mxu0 %v442
    %526 = vmatprep.subr.mxu0 0.0
    %527 = vmatpush1.msra.mxu0 %v441
    %528 = vmatprep.subr.mxu0 0.0
    %529 = vmatpush1.msra.mxu0 %v440
    %530 = vmatprep.subr.mxu0 0.0
    %531 = vmatpush1.msra.mxu0 %v439
    %532 = vmatprep.subr.mxu0 0.0
    %533 = vmatpush1.msra.mxu0 %v438
    %534 = vmatprep.subr.mxu0 0.0
    %535 = vmatpush1.msra.mxu0 %v437
    %536 = vmatprep.subr.mxu0 0.0
    %537 = vmatpush1.msra.mxu0 %v436
    %538 = vmatprep.subr.mxu0 0.0
    %539 = vmatpush1.msra.mxu0 %v435
    %540 = vmatprep.subr.mxu0 0.0
    %541 = vmatpush1.msra.mxu0 %v434
    %542 = vmatprep.subr.mxu0 0.0
    %543 = vmatpush1.msra.mxu0 %v433
    %544 = vmatprep.subr.mxu0 0.0
    %545 = vmatpush1.msra.mxu0 %v432
    %546 = vmatprep.subr.mxu0 0.0
    %547 = vmatpush1.msra.mxu0 %v431
    %548 = vmatprep.subr.mxu0 0.0
    %549 = vmatpush1.msra.mxu0 %v430
    %550 = vmatprep.subr.mxu0 0.0
    %551 = vmatpush1.msra.mxu0 %v429
    %552 = vmatprep.subr.mxu0 0.0
    %553 = vmatpush1.msra.mxu0 %v428
    %554 = vmatprep.subr.mxu0 0.0
    %555 = vmatpush2.msra.mxu0 %v459
    %556 = vmatprep.subr.mxu0 0.0
    %557 = vmatpush2.msra.mxu0 %v458
    %558 = vmatprep.subr.mxu0 0.0
    %559 = vmatpush2.msra.mxu0 %v457
    %560 = vmatprep.subr.mxu0 0.0
    %561 = vmatpush2.msra.mxu0 %v456
    %562 = vmatprep.subr.mxu0 0.0
    %563 = vmatpush2.msra.mxu0 %v455
    %564 = vmatprep.subr.mxu0 0.0
    %565 = vmatpush2.msra.mxu0 %v454
    %566 = vmatprep.subr.mxu0 0.0
    %567 = vmatpush2.msra.mxu0 %v453
    %568 = vmatprep.subr.mxu0 0.0
    %569 = vmatpush2.msra.mxu0 %v452
    %570 = vmatprep.subr.mxu0 0.0
    %571 = vmatpush2.msra.mxu0 %v451
    %572 = vmatprep.subr.mxu0 0.0
    %573 = vmatpush2.msra.mxu0 %v450
    %574 = vmatprep.subr.mxu0 0.0
    %575 = vmatpush2.msra.mxu0 %v449
    %576 = vmatprep.subr.mxu0 0.0
    %577 = vmatpush2.msra.mxu0 %v448
    %578 = vmatprep.subr.mxu0 0.0
    %579 = vmatpush2.msra.mxu0 %v447
    %580 = vmatprep.subr.mxu0 0.0
    %581 = vmatpush2.msra.mxu0 %v446
    %582 = vmatprep.subr.mxu0 0.0
    %583 = vmatpush2.msra.mxu0 %v445
    %584 = vmatprep.subr.mxu0 0.0
    %585 = vmatpush2.msra.mxu0 %v444
    %586 = vmatprep.mubr.f32.mxu0 %v360
    %587 = vmatmul.mubr.f32.gmra.mxu0 %v340
    %v588 = vpop.f32.mrf.mxu0
    %v589 = vadd.f32 0.0, %v588
    %v590 = vpop.f32.mrf.mxu0
    %591 = vmatprep.mubr.f32.mxu0 %v361
    %592 = vmatmul.mubr.f32.gmra.mxu0 %v341
    %v593 = vpop.f32.mrf.mxu0
    %v594 = vadd.f32 0.0, %v593
    %v595 = vpop.f32.mrf.mxu0
    %596 = vmatprep.mubr.f32.mxu0 %v362
    %597 = vmatmul.mubr.f32.gmra.mxu0 %v342
    %v598 = vpop.f32.mrf.mxu0
    %v599 = vadd.f32 0.0, %v598
    %v600 = vpop.f32.mrf.mxu0
    %601 = vmatprep.mubr.f32.mxu0 %v363
    %602 = vmatmul.mubr.f32.gmra.mxu0 %v343
    %v603 = vpop.f32.mrf.mxu0
    %v604 = vadd.f32 0.0, %v603
    %v605 = vpop.f32.mrf.mxu0
    %606 = vdwg.mxu0
    %607 = vmatprep.subr.mxu0 0.0
    %608 = vmatpush1.msra.mxu0 %v475
    %609 = vmatprep.subr.mxu0 0.0
    %610 = vmatpush1.msra.mxu0 %v474
    %611 = vmatprep.subr.mxu0 0.0
    %612 = vmatpush1.msra.mxu0 %v473
    %613 = vmatprep.subr.mxu0 0.0
    %614 = vmatpush1.msra.mxu0 %v472
    %615 = vmatprep.subr.mxu0 0.0
    %616 = vmatpush1.msra.mxu0 %v471
    %617 = vmatprep.subr.mxu0 0.0
    %618 = vmatpush1.msra.mxu0 %v470
    %619 = vmatprep.subr.mxu0 0.0
    %620 = vmatpush1.msra.mxu0 %v469
    %621 = vmatprep.subr.mxu0 0.0
    %622 = vmatpush1.msra.mxu0 %v468
    %623 = vmatprep.subr.mxu0 0.0
    %624 = vmatpush1.msra.mxu0 %v467
    %625 = vmatprep.subr.mxu0 0.0
    %626 = vmatpush1.msra.mxu0 %v466
    %627 = vmatprep.subr.mxu0 0.0
    %628 = vmatpush1.msra.mxu0 %v465
    %629 = vmatprep.subr.mxu0 0.0
    %630 = vmatpush1.msra.mxu0 %v464
    %631 = vmatprep.subr.mxu0 0.0
    %632 = vmatpush1.msra.mxu0 %v463
    %633 = vmatprep.subr.mxu0 0.0
    %634 = vmatpush1.msra.mxu0 %v462
    %635 = vmatprep.subr.mxu0 0.0
    %636 = vmatpush1.msra.mxu0 %v461
    %637 = vmatprep.subr.mxu0 0.0
    %638 = vmatpush1.msra.mxu0 %v460
    %639 = vmatprep.subr.mxu0 0.0
    %640 = vmatpush2.msra.mxu0 %v491
    %641 = vmatprep.subr.mxu0 0.0
    %642 = vmatpush2.msra.mxu0 %v490
    %643 = vmatprep.subr.mxu0 0.0
    %644 = vmatpush2.msra.mxu0 %v489
    %645 = vmatprep.subr.mxu0 0.0
    %646 = vmatpush2.msra.mxu0 %v488
    %647 = vmatprep.subr.mxu0 0.0
    %648 = vmatpush2.msra.mxu0 %v487
    %649 = vmatprep.subr.mxu0 0.0
    %650 = vmatpush2.msra.mxu0 %v486
    %651 = vmatprep.subr.mxu0 0.0
    %652 = vmatpush2.msra.mxu0 %v485
    %653 = vmatprep.subr.mxu0 0.0
    %654 = vmatpush2.msra.mxu0 %v484
    %655 = vmatprep.subr.mxu0 0.0
    %656 = vmatpush2.msra.mxu0 %v483
    %657 = vmatprep.subr.mxu0 0.0
    %658 = vmatpush2.msra.mxu0 %v482
    %659 = vmatprep.subr.mxu0 0.0
    %660 = vmatpush2.msra.mxu0 %v481
    %661 = vmatprep.subr.mxu0 0.0
    %662 = vmatpush2.msra.mxu0 %v480
    %663 = vmatprep.subr.mxu0 0.0
    %664 = vmatpush2.msra.mxu0 %v479
    %665 = vmatprep.subr.mxu0 0.0
    %666 = vmatpush2.msra.mxu0 %v478
    %667 = vmatprep.subr.mxu0 0.0
    %668 = vmatpush2.msra.mxu0 %v477
    %669 = vmatprep.subr.mxu0 0.0
    %670 = vmatpush2.msra.mxu0 %v476
    %671 = vmatprep.mubr.f32.mxu0 %v400
    %672 = vmatmul.mubr.f32.gmra.mxu0 %v380
    %v673 = vpop.f32.mrf.mxu0
    %v674 = vadd.f32 %v589, %v673
    %v675 = vpop.f32.mrf.mxu0
    %676 = vmatprep.mubr.f32.mxu0 %v401
    %677 = vmatmul.mubr.f32.gmra.mxu0 %v381
    %v678 = vpop.f32.mrf.mxu0
    %v679 = vadd.f32 %v594, %v678
    %v680 = vpop.f32.mrf.mxu0
    %681 = vmatprep.mubr.f32.mxu0 %v402
    %682 = vmatmul.mubr.f32.gmra.mxu0 %v382
    %v683 = vpop.f32.mrf.mxu0
    %v684 = vadd.f32 %v599, %v683
    %v685 = vpop.f32.mrf.mxu0
    %686 = vmatprep.mubr.f32.mxu0 %v403
    %687 = vmatmul.mubr.f32.gmra.mxu0 %v383
    %v688 = vpop.f32.mrf.mxu0
    %v689 = vadd.f32 %v604, %v688
    %v690 = vpop.f32.mrf.mxu0
    %691 = vdwg.mxu0
    %692 = vmatprep.subr.mxu0 0.0
    %693 = vmatpush1.msra.mxu0 %v507
    %694 = vmatprep.subr.mxu0 0.0
    %695 = vmatpush1.msra.mxu0 %v506
    %696 = vmatprep.subr.mxu0 0.0
    %697 = vmatpush1.msra.mxu0 %v505
    %698 = vmatprep.subr.mxu0 0.0
    %699 = vmatpush1.msra.mxu0 %v504
    %700 = vmatprep.subr.mxu0 0.0
    %701 = vmatpush1.msra.mxu0 %v503
    %702 = vmatprep.subr.mxu0 0.0
    %703 = vmatpush1.msra.mxu0 %v502
    %704 = vmatprep.subr.mxu0 0.0
    %705 = vmatpush1.msra.mxu0 %v501
    %706 = vmatprep.subr.mxu0 0.0
    %707 = vmatpush1.msra.mxu0 %v500
    %708 = vmatprep.subr.mxu0 0.0
    %709 = vmatpush1.msra.mxu0 %v499
    %710 = vmatprep.subr.mxu0 0.0
    %711 = vmatpush1.msra.mxu0 %v498
    %712 = vmatprep.subr.mxu0 0.0
    %713 = vmatpush1.msra.mxu0 %v497
    %714 = vmatprep.subr.mxu0 0.0
    %715 = vmatpush1.msra.mxu0 %v496
    %716 = vmatprep.subr.mxu0 0.0
    %717 = vmatpush1.msra.mxu0 %v495
    %718 = vmatprep.subr.mxu0 0.0
    %719 = vmatpush1.msra.mxu0 %v494
    %720 = vmatprep.subr.mxu0 0.0
    %721 = vmatpush1.msra.mxu0 %v493
    %722 = vmatprep.subr.mxu0 0.0
    %723 = vmatpush1.msra.mxu0 %v492
    %724 = vmatprep.subr.mxu0 0.0
    %725 = vmatpush2.msra.mxu0 0.0
    %726 = vmatprep.subr.mxu0 0.0
    %727 = vmatpush2.msra.mxu0 0.0
    %728 = vmatprep.subr.mxu0 0.0
    %729 = vmatpush2.msra.mxu0 0.0
    %730 = vmatprep.subr.mxu0 0.0
    %731 = vmatpush2.msra.mxu0 0.0
    %732 = vmatprep.subr.mxu0 0.0
    %733 = vmatpush2.msra.mxu0 0.0
    %734 = vmatprep.subr.mxu0 0.0
    %735 = vmatpush2.msra.mxu0 0.0
    %736 = vmatprep.subr.mxu0 0.0
    %737 = vmatpush2.msra.mxu0 0.0
    %738 = vmatprep.subr.mxu0 0.0
    %739 = vmatpush2.msra.mxu0 0.0
    %740 = vmatprep.subr.mxu0 0.0
    %741 = vmatpush2.msra.mxu0 0.0
    %742 = vmatprep.subr.mxu0 0.0
    %743 = vmatpush2.msra.mxu0 0.0
    %744 = vmatprep.subr.mxu0 0.0
    %745 = vmatpush2.msra.mxu0 0.0
    %746 = vmatprep.subr.mxu0 0.0
    %747 = vmatpush2.msra.mxu0 0.0
    %748 = vmatprep.subr.mxu0 0.0
    %749 = vmatpush2.msra.mxu0 0.0
    %750 = vmatprep.subr.mxu0 0.0
    %751 = vmatpush2.msra.mxu0 0.0
    %752 = vmatprep.subr.mxu0 0.0
    %753 = vmatpush2.msra.mxu0 0.0
    %754 = vmatprep.subr.mxu0 0.0
    %755 = vmatpush2.msra.mxu0 %v508
    %756 = vmatprep.mubr.f32.mxu0 %v511
    %757 = vmatmul.mubr.f32.gmra.mxu0 %v420
    %v758 = vpop.f32.mrf.mxu0
    %v759 = vadd.f32 %v674, %v758
    %v760 = vpop.f32.mrf.mxu0
    %761 = vmatprep.mubr.f32.mxu0 %v514
    %762 = vmatmul.mubr.f32.gmra.mxu0 %v421
    %v763 = vpop.f32.mrf.mxu0
    %v764 = vadd.f32 %v679, %v763
    %v765 = vpop.f32.mrf.mxu0
    %766 = vmatprep.mubr.f32.mxu0 %v517
    %767 = vmatmul.mubr.f32.gmra.mxu0 %v422
    %v768 = vpop.f32.mrf.mxu0
    %v769 = vadd.f32 %v684, %v768
    %v770 = vpop.f32.mrf.mxu0
    %771 = vmatprep.mubr.f32.mxu0 %v520
    %772 = vmatmul.mubr.f32.gmra.mxu0 %v423
    %v773 = vpop.f32.mrf.mxu0
    %v774 = vadd.f32 %v689, %v773
    %v775 = vpop.f32.mrf.mxu0
    %776 = vdwg.mxu0
    %v777 = vld [vmem:[%s5] sm:$0xff]
    %v778 = vld [vmem:[%s5 + $0x8] sm:$0xff]
    %v779 = vld [vmem:[%s5 + $0x10] sm:$0xff]
    %v780 = vld [vmem:[%s5 + $0x18] sm:$0xff]
    %v781 = vld [vmem:[%s5 + $0x20] sm:$0xff]
    %v782 = vld [vmem:[%s5 + $0x28] sm:$0xff]
    %v783 = vld [vmem:[%s5 + $0x30] sm:$0xff]
    %v784 = vld [vmem:[%s5 + $0x38] sm:$0xff]
    %785 = vset.pattern.permute.xlu0 3
    %786 = vperm.xlu0 %785, %v50
    %v787 = vpop.permute.xlu0 %786
    %789 = vset.pattern.permute.xlu0 3
    %790 = vperm.xlu0 %789, %v51
    %v791 = vpop.permute.xlu0 %790
    %793 = vset.pattern.permute.xlu0 3
    %794 = vperm.xlu0 %793, %v52
    %v795 = vpop.permute.xlu0 %794
    %797 = vset.pattern.permute.xlu0 3
    %798 = vperm.xlu0 %797, %v53
    %v799 = vpop.permute.xlu0 %798
    %802 = vset.pattern.permute.xlu0 3
    %803 = vperm.xlu0 %802, %v54
    %v804 = vpop.permute.xlu0 %803
    %807 = vset.pattern.permute.xlu0 3
    %808 = vperm.xlu0 %807, %v55
    %v809 = vpop.permute.xlu0 %808
    %812 = vset.pattern.permute.xlu0 3
    %813 = vperm.xlu0 %812, %v56
    %v814 = vpop.permute.xlu0 %813
    %817 = vset.pattern.permute.xlu0 3
    %818 = vperm.xlu0 %817, %v57
    %v819 = vpop.permute.xlu0 %818
    %v822 = vsel %vm166, %v777, 0
    %v825 = vsel %vm166, %v778, 0
    %v828 = vsel %vm166, %v779, 0
    %v831 = vsel %vm166, %v780, 0
    %v834 = vsel %vm166, %v781, 0
    %v837 = vsel %vm166, %v782, 0
    %v840 = vsel %vm166, %v783, 0
    %v843 = vsel %vm166, %v784, 0
    %845 = vmatprep.subr.mxu0 0.0
    %846 = vmatpush1.msra.mxu0 0.0
    %847 = vmatprep.subr.mxu0 0.0
    %848 = vmatpush1.msra.mxu0 0.0
    %849 = vmatprep.subr.mxu0 0.0
    %850 = vmatpush1.msra.mxu0 0.0
    %851 = vmatprep.subr.mxu0 0.0
    %852 = vmatpush1.msra.mxu0 0.0
    %853 = vmatprep.subr.mxu0 0.0
    %854 = vmatpush1.msra.mxu0 0.0
    %855 = vmatprep.subr.mxu0 0.0
    %856 = vmatpush1.msra.mxu0 0.0
    %857 = vmatprep.subr.mxu0 0.0
    %858 = vmatpush1.msra.mxu0 0.0
    %859 = vmatprep.subr.mxu0 0.0
    %860 = vmatpush1.msra.mxu0 0.0
    %861 = vmatprep.subr.mxu0 0.0
    %862 = vmatpush1.msra.mxu0 0.0
    %863 = vmatprep.subr.mxu0 0.0
    %864 = vmatpush1.msra.mxu0 0.0
    %865 = vmatprep.subr.mxu0 0.0
    %866 = vmatpush1.msra.mxu0 0.0
    %867 = vmatprep.subr.mxu0 0.0
    %868 = vmatpush1.msra.mxu0 0.0
    %869 = vmatprep.subr.mxu0 0.0
    %870 = vmatpush1.msra.mxu0 %v774
    %871 = vmatprep.subr.mxu0 0.0
    %872 = vmatpush1.msra.mxu0 %v769
    %873 = vmatprep.subr.mxu0 0.0
    %874 = vmatpush1.msra.mxu0 %v764
    %875 = vmatprep.subr.mxu0 0.0
    %876 = vmatpush1.msra.mxu0 %v759
    %877 = vmatprep.subr.mxu0 0.0
    %878 = vmatpush2.msra.mxu0 0.0
    %879 = vmatprep.subr.mxu0 0.0
    %880 = vmatpush2.msra.mxu0 0.0
    %881 = vmatprep.subr.mxu0 0.0
    %882 = vmatpush2.msra.mxu0 0.0
    %883 = vmatprep.subr.mxu0 0.0
    %884 = vmatpush2.msra.mxu0 0.0
    %885 = vmatprep.subr.mxu0 0.0
    %886 = vmatpush2.msra.mxu0 0.0
    %887 = vmatprep.subr.mxu0 0.0
    %888 = vmatpush2.msra.mxu0 0.0
    %889 = vmatprep.subr.mxu0 0.0
    %890 = vmatpush2.msra.mxu0 0.0
    %891 = vmatprep.subr.mxu0 0.0
    %892 = vmatpush2.msra.mxu0 0.0
    %893 = vmatprep.subr.mxu0 0.0
    %894 = vmatpush2.msra.mxu0 0.0
    %895 = vmatprep.subr.mxu0 0.0
    %896 = vmatpush2.msra.mxu0 0.0
    %897 = vmatprep.subr.mxu0 0.0
    %898 = vmatpush2.msra.mxu0 0.0
    %899 = vmatprep.subr.mxu0 0.0
    %900 = vmatpush2.msra.mxu0 0.0
    %901 = vmatprep.subr.mxu0 0.0
    %902 = vmatpush2.msra.mxu0 0.0
    %903 = vmatprep.subr.mxu0 0.0
    %904 = vmatpush2.msra.mxu0 0.0
    %905 = vmatprep.subr.mxu0 0.0
    %906 = vmatpush2.msra.mxu0 0.0
    %907 = vmatprep.subr.mxu0 0.0
    %908 = vmatpush2.msra.mxu0 0.0
    %909 = vmatprep.mubr.f32.mxu0 0.0
    %910 = vmatmul.mubr.f32.gmra.mxu0 %v822
    %v911 = vpop.f32.mrf.mxu0
    %v912 = vadd.f32 %v787, %v911
    %v913 = vpop.f32.mrf.mxu0
    %914 = vmatprep.mubr.f32.mxu0 0.0
    %915 = vmatmul.mubr.f32.gmra.mxu0 %v825
    %v916 = vpop.f32.mrf.mxu0
    %v917 = vadd.f32 %v791, %v916
    %v918 = vpop.f32.mrf.mxu0
    %919 = vmatprep.mubr.f32.mxu0 0.0
    %920 = vmatmul.mubr.f32.gmra.mxu0 %v828
    %v921 = vpop.f32.mrf.mxu0
    %v922 = vadd.f32 %v795, %v921
    %v923 = vpop.f32.mrf.mxu0
    %924 = vmatprep.mubr.f32.mxu0 0.0
    %925 = vmatmul.mubr.f32.gmra.mxu0 %v831
    %v926 = vpop.f32.mrf.mxu0
    %v927 = vadd.f32 %v799, %v926
    %v928 = vpop.f32.mrf.mxu0
    %929 = vmatprep.mubr.f32.mxu0 0.0
    %930 = vmatmul.mubr.f32.gmra.mxu0 %v834
    %v931 = vpop.f32.mrf.mxu0
    %v932 = vadd.f32 %v804, %v931
    %v933 = vpop.f32.mrf.mxu0
    %934 = vmatprep.mubr.f32.mxu0 0.0
    %935 = vmatmul.mubr.f32.gmra.mxu0 %v837
    %v936 = vpop.f32.mrf.mxu0
    %v937 = vadd.f32 %v809, %v936
    %v938 = vpop.f32.mrf.mxu0
    %939 = vmatprep.mubr.f32.mxu0 0.0
    %940 = vmatmul.mubr.f32.gmra.mxu0 %v840
    %v941 = vpop.f32.mrf.mxu0
    %v942 = vadd.f32 %v814, %v941
    %v943 = vpop.f32.mrf.mxu0
    %944 = vmatprep.mubr.f32.mxu0 0.0
    %945 = vmatmul.mubr.f32.gmra.mxu0 %v843
    %v946 = vpop.f32.mrf.mxu0
    %v947 = vadd.f32 %v819, %v946
    %v948 = vpop.f32.mrf.mxu0
    %949 = vdwg.mxu0
    %v950 = vmul.f32 %v912, 0.5
    %v951 = vmul.f32 %v917, 0.5
    %v952 = vmul.f32 %v922, 0.5
    %v953 = vmul.f32 %v927, 0.5
    %v954 = vmul.f32 %v932, 0.5
    %v955 = vmul.f32 %v937, 0.5
    %v956 = vmul.f32 %v942, 0.5
    %v957 = vmul.f32 %v947, 0.5
    %v958 = vmul.f32 %v912, %v141
    %v959 = vmul.f32 %v917, %v141
    %v960 = vmul.f32 %v922, %v141
    %v961 = vmul.f32 %v927, %v141
    %v962 = vmul.f32 %v932, %v141
    %v963 = vmul.f32 %v937, %v141
    %v964 = vmul.f32 %v942, %v141
    %v965 = vmul.f32 %v947, %v141
    %v966 = verf.f32.pop %v958
    %v967 = verf.f32.pop %v959
    %v968 = verf.f32.pop %v960
    %v969 = verf.f32.pop %v961
    %v970 = verf.f32.pop %v962
    %v971 = verf.f32.pop %v963
    %v972 = verf.f32.pop %v964
    %v973 = verf.f32.pop %v965
    %v974 = vadd.f32 %v966, 1.0
    %v975 = vadd.f32 %v967, 1.0
    %v976 = vadd.f32 %v968, 1.0
    %v977 = vadd.f32 %v969, 1.0
    %v978 = vadd.f32 %v970, 1.0
    %v979 = vadd.f32 %v971, 1.0
    %v980 = vadd.f32 %v972, 1.0
    %v981 = vadd.f32 %v973, 1.0
    %v982 = vmul.f32 %v950, %v974
    %v983 = vmul.f32 %v951, %v975
    %v984 = vmul.f32 %v952, %v976
    %v985 = vmul.f32 %v953, %v977
    %v986 = vmul.f32 %v954, %v978
    %v987 = vmul.f32 %v955, %v979
    %v988 = vmul.f32 %v956, %v980
    %v989 = vmul.f32 %v957, %v981
    %v990 = vld [vmem:[%s6] sm:$0xff]
    %v991 = vld [vmem:[%s6 + $0x8] sm:$0xff]
    %v992 = vld [vmem:[%s6 + $0x10] sm:$0xff]
    %v993 = vld [vmem:[%s6 + $0x18] sm:$0xff]
    %994 = vset.pattern.permute.xlu0 4
    %995 = vperm.xlu0 %994, %v50
    %v996 = vpop.permute.xlu0 %995
    %998 = vset.pattern.permute.xlu0 4
    %999 = vperm.xlu0 %998, %v51
    %v1000 = vpop.permute.xlu0 %999
    %1002 = vset.pattern.permute.xlu0 4
    %1003 = vperm.xlu0 %1002, %v52
    %v1004 = vpop.permute.xlu0 %1003
    %1006 = vset.pattern.permute.xlu0 4
    %1007 = vperm.xlu0 %1006, %v53
    %v1008 = vpop.permute.xlu0 %1007
    %vm1010 = vcmask 523264
    %v1012 = vsel %vm1010, %v990, 0
    %v1015 = vsel %vm1010, %v991, 0
    %v1018 = vsel %vm1010, %v992, 0
    %v1021 = vsel %vm1010, %v993, 0
    %1023 = vmatprep.subr.mxu0 0.0
    %1024 = vmatpush1.msra.mxu0 0.0
    %1025 = vmatprep.subr.mxu0 0.0
    %1026 = vmatpush1.msra.mxu0 0.0
    %1027 = vmatprep.subr.mxu0 0.0
    %1028 = vmatpush1.msra.mxu0 0.0
    %1029 = vmatprep.subr.mxu0 0.0
    %1030 = vmatpush1.msra.mxu0 0.0
    %1031 = vmatprep.subr.mxu0 0.0
    %1032 = vmatpush1.msra.mxu0 0.0
    %1033 = vmatprep.subr.mxu0 0.0
    %1034 = vmatpush1.msra.mxu0 0.0
    %1035 = vmatprep.subr.mxu0 0.0
    %1036 = vmatpush1.msra.mxu0 0.0
    %1037 = vmatprep.subr.mxu0 0.0
    %1038 = vmatpush1.msra.mxu0 0.0
    %1039 = vmatprep.subr.mxu0 0.0
    %1040 = vmatpush1.msra.mxu0 %v989
    %1041 = vmatprep.subr.mxu0 0.0
    %1042 = vmatpush1.msra.mxu0 %v988
    %1043 = vmatprep.subr.mxu0 0.0
    %1044 = vmatpush1.msra.mxu0 %v987
    %1045 = vmatprep.subr.mxu0 0.0
    %1046 = vmatpush1.msra.mxu0 %v986
    %1047 = vmatprep.subr.mxu0 0.0
    %1048 = vmatpush1.msra.mxu0 %v985
    %1049 = vmatprep.subr.mxu0 0.0
    %1050 = vmatpush1.msra.mxu0 %v984
    %1051 = vmatprep.subr.mxu0 0.0
    %1052 = vmatpush1.msra.mxu0 %v983
    %1053 = vmatprep.subr.mxu0 0.0
    %1054 = vmatpush1.msra.mxu0 %v982
    %1055 = vmatprep.subr.mxu0 0.0
    %1056 = vmatpush2.msra.mxu0 0.0
    %1057 = vmatprep.subr.mxu0 0.0
    %1058 = vmatpush2.msra.mxu0 0.0
    %1059 = vmatprep.subr.mxu0 0.0
    %1060 = vmatpush2.msra.mxu0 0.0
    %1061 = vmatprep.subr.mxu0 0.0
    %1062 = vmatpush2.msra.mxu0 0.0
    %1063 = vmatprep.subr.mxu0 0.0
    %1064 = vmatpush2.msra.mxu0 0.0
    %1065 = vmatprep.subr.mxu0 0.0
    %1066 = vmatpush2.msra.mxu0 0.0
    %1067 = vmatprep.subr.mxu0 0.0
    %1068 = vmatpush2.msra.mxu0 0.0
    %1069 = vmatprep.subr.mxu0 0.0
    %1070 = vmatpush2.msra.mxu0 0.0
    %1071 = vmatprep.subr.mxu0 0.0
    %1072 = vmatpush2.msra.mxu0 0.0
    %1073 = vmatprep.subr.mxu0 0.0
    %1074 = vmatpush2.msra.mxu0 0.0
    %1075 = vmatprep.subr.mxu0 0.0
    %1076 = vmatpush2.msra.mxu0 0.0
    %1077 = vmatprep.subr.mxu0 0.0
    %1078 = vmatpush2.msra.mxu0 0.0
    %1079 = vmatprep.subr.mxu0 0.0
    %1080 = vmatpush2.msra.mxu0 0.0
    %1081 = vmatprep.subr.mxu0 0.0
    %1082 = vmatpush2.msra.mxu0 0.0
    %1083 = vmatprep.subr.mxu0 0.0
    %1084 = vmatpush2.msra.mxu0 0.0
    %1085 = vmatprep.subr.mxu0 0.0
    %1086 = vmatpush2.msra.mxu0 0.0
    %1087 = vmatprep.mubr.f32.mxu0 0.0
    %1088 = vmatmul.mubr.f32.gmra.mxu0 %v1012
    %v1089 = vpop.f32.mrf.mxu0
    %v1090 = vadd.f32 %v996, %v1089
    %v1091 = vpop.f32.mrf.mxu0
    %1092 = vmatprep.mubr.f32.mxu0 0.0
    %1093 = vmatmul.mubr.f32.gmra.mxu0 %v1015
    %v1094 = vpop.f32.mrf.mxu0
    %v1095 = vadd.f32 %v1000, %v1094
    %v1096 = vpop.f32.mrf.mxu0
    %1097 = vmatprep.mubr.f32.mxu0 0.0
    %1098 = vmatmul.mubr.f32.gmra.mxu0 %v1018
    %v1099 = vpop.f32.mrf.mxu0
    %v1100 = vadd.f32 %v1004, %v1099
    %v1101 = vpop.f32.mrf.mxu0
    %1102 = vmatprep.mubr.f32.mxu0 0.0
    %1103 = vmatmul.mubr.f32.gmra.mxu0 %v1021
    %v1104 = vpop.f32.mrf.mxu0
    %v1105 = vadd.f32 %v1008, %v1104
    %v1106 = vpop.f32.mrf.mxu0
    %1107 = vdwg.mxu0
    %v1108 = vmul.f32 %v1090, %v312
    %v1109 = vmul.f32 %v1095, %v313
    %v1110 = vmul.f32 %v1100, %v314
    %v1111 = vmul.f32 %v1105, %v315
    %1112 = vadd.xlane.f32.xlu0 %v1108
    %v1113 = vpop.xlane.xlu0 %1112
    %1114 = vadd.xlane.f32.xlu0 %v1109
    %v1115 = vpop.xlane.xlu0 %1114
    %1116 = vadd.xlane.f32.xlu0 %v1110
    %v1117 = vpop.xlane.xlu0 %1116
    %1118 = vadd.xlane.f32.xlu0 %v1111
    %v1119 = vpop.xlane.xlu0 %1118
    %v1120 = vrcp.pop 128.0
    %v1121 = vmul.f32 %v1113, %v1120
    %v1122 = vmul.f32 %v1115, %v1120
    %v1123 = vmul.f32 %v1117, %v1120
    %v1124 = vmul.f32 %v1119, %v1120
    %v1125 = vsub.f32 %v1108, %v1121
    %v1126 = vsub.f32 %v1109, %v1122
    %v1127 = vsub.f32 %v1110, %v1123
    %v1128 = vsub.f32 %v1111, %v1124
    %v1129 = vmul.f32 %v1125, %v1125
    %v1130 = vmul.f32 %v1126, %v1126
    %v1131 = vmul.f32 %v1127, %v1127
    %v1132 = vmul.f32 %v1128, %v1128
    %1133 = vadd.xlane.f32.xlu0 %v1129
    %v1134 = vpop.xlane.xlu0 %1133
    %1135 = vadd.xlane.f32.xlu0 %v1130
    %v1136 = vpop.xlane.xlu0 %1135
    %1137 = vadd.xlane.f32.xlu0 %v1131
    %v1138 = vpop.xlane.xlu0 %1137
    %1139 = vadd.xlane.f32.xlu0 %v1132
    %v1140 = vpop.xlane.xlu0 %1139
    %v1141 = vmul.f32 %v1134, %v1120
    %v1142 = vmul.f32 %v1136, %v1120
    %v1143 = vmul.f32 %v1138, %v1120
    %v1144 = vmul.f32 %v1140, %v1120
    %v1145 = vadd.f32 %v1141, 1e-05
    %v1146 = vadd.f32 %v1142, 1e-05
    %v1147 = vadd.f32 %v1143, 1e-05
    %v1148 = vadd.f32 %v1144, 1e-05
    %v1149 = vrsqrt.pop %v1145
    %v1150 = vrsqrt.pop %v1146
    %v1151 = vrsqrt.pop %v1147
    %v1152 = vrsqrt.pop %v1148
    %v1153 = vmul.f32 %v1125, %v1149
    %v1154 = vmul.f32 %v1126, %v1150
    %v1155 = vmul.f32 %v1127, %v1151
    %v1156 = vmul.f32 %v1128, %v1152
    %1157 = vset.pattern.permute.xlu0 5
    %1158 = vperm.xlu0 %1157, %v50
    %v1159 = vpop.permute.xlu0 %1158
    %1161 = vset.pattern.permute.xlu0 5
    %1162 = vperm.xlu0 %1161, %v51
    %v1163 = vpop.permute.xlu0 %1162
    %1165 = vset.pattern.permute.xlu0 5
    %1166 = vperm.xlu0 %1165, %v52
    %v1167 = vpop.permute.xlu0 %1166
    %1169 = vset.pattern.permute.xlu0 5
    %1170 = vperm.xlu0 %1169, %v53
    %v1171 = vpop.permute.xlu0 %1170
    %v1173 = vmul.f32 %v1159, %v1153
    %v1174 = vmul.f32 %v1163, %v1154
    %v1175 = vmul.f32 %v1167, %v1155
    %v1176 = vmul.f32 %v1171, %v1156
    %1177 = vset.pattern.permute.xlu0 6
    %1178 = vperm.xlu0 %1177, %v50
    %v1179 = vpop.permute.xlu0 %1178
    %1181 = vset.pattern.permute.xlu0 6
    %1182 = vperm.xlu0 %1181, %v51
    %v1183 = vpop.permute.xlu0 %1182
    %1185 = vset.pattern.permute.xlu0 6
    %1186 = vperm.xlu0 %1185, %v52
    %v1187 = vpop.permute.xlu0 %1186
    %1189 = vset.pattern.permute.xlu0 6
    %1190 = vperm.xlu0 %1189, %v53
    %v1191 = vpop.permute.xlu0 %1190
    %v1193 = vadd.f32 %v1173, %v1179
    %v1194 = vadd.f32 %v1174, %v1183
    %v1195 = vadd.f32 %v1175, %v1187
    %v1196 = vadd.f32 %v1176, %v1191
    %v1197 = vmul.f32 %v1193, 0.5
    %v1198 = vmul.f32 %v1194, 0.5
    %v1199 = vmul.f32 %v1195, 0.5
    %v1200 = vmul.f32 %v1196, 0.5
    %v1201 = vmul.f32 %v1193, %v141
    %v1202 = vmul.f32 %v1194, %v141
    %v1203 = vmul.f32 %v1195, %v141
    %v1204 = vmul.f32 %v1196, %v141
    %v1205 = verf.f32.pop %v1201
    %v1206 = verf.f32.pop %v1202
    %v1207 = verf.f32.pop %v1203
    %v1208 = verf.f32.pop %v1204
    %v1209 = vadd.f32 %v1205, 1.0
    %v1210 = vadd.f32 %v1206, 1.0
    %v1211 = vadd.f32 %v1207, 1.0
    %v1212 = vadd.f32 %v1208, 1.0
    %v1213 = vmul.f32 %v1197, %v1209
    %v1214 = vmul.f32 %v1198, %v1210
    %v1215 = vmul.f32 %v1199, %v1211
    %v1216 = vmul.f32 %v1200, %v1212
    %v1217 = vld [vmem:[%s7] sm:$0xff]
    %v1218 = vld [vmem:[%s7 + $0x8] sm:$0xff]
    %v1219 = vld [vmem:[%s7 + $0x10] sm:$0xff]
    %v1220 = vld [vmem:[%s7 + $0x18] sm:$0xff]
    %1221 = vset.pattern.permute.xlu0 7
    %1222 = vperm.xlu0 %1221, %v50
    %v1223 = vpop.permute.xlu0 %1222
    %1225 = vset.pattern.permute.xlu0 7
    %1226 = vperm.xlu0 %1225, %v51
    %v1227 = vpop.permute.xlu0 %1226
    %1229 = vset.pattern.permute.xlu0 7
    %1230 = vperm.xlu0 %1229, %v52
    %v1231 = vpop.permute.xlu0 %1230
    %1233 = vset.pattern.permute.xlu0 7
    %1234 = vperm.xlu0 %1233, %v53
    %v1235 = vpop.permute.xlu0 %1234
    %v1238 = vsel %vm166, %v1217, 0
    %v1241 = vsel %vm166, %v1218, 0
    %v1244 = vsel %vm166, %v1219, 0
    %v1247 = vsel %vm166, %v1220, 0
    %1249 = vmatprep.subr.mxu0 0.0
    %1250 = vmatpush1.msra.mxu0 0.0
    %1251 = vmatprep.subr.mxu0 0.0
    %1252 = vmatpush1.msra.mxu0 0.0
    %1253 = vmatprep.subr.mxu0 0.0
    %1254 = vmatpush1.msra.mxu0 0.0
    %1255 = vmatprep.subr.mxu0 0.0
    %1256 = vmatpush1.msra.mxu0 0.0
    %1257 = vmatprep.subr.mxu0 0.0
    %1258 = vmatpush1.msra.mxu0 0.0
    %1259 = vmatprep.subr.mxu0 0.0
    %1260 = vmatpush1.msra.mxu0 0.0
    %1261 = vmatprep.subr.mxu0 0.0
    %1262 = vmatpush1.msra.mxu0 0.0
    %1263 = vmatprep.subr.mxu0 0.0
    %1264 = vmatpush1.msra.mxu0 0.0
    %1265 = vmatprep.subr.mxu0 0.0
    %1266 = vmatpush1.msra.mxu0 0.0
    %1267 = vmatprep.subr.mxu0 0.0
    %1268 = vmatpush1.msra.mxu0 0.0
    %1269 = vmatprep.subr.mxu0 0.0
    %1270 = vmatpush1.msra.mxu0 0.0
    %1271 = vmatprep.subr.mxu0 0.0
    %1272 = vmatpush1.msra.mxu0 0.0
    %1273 = vmatprep.subr.mxu0 0.0
    %1274 = vmatpush1.msra.mxu0 %v1216
    %1275 = vmatprep.subr.mxu0 0.0
    %1276 = vmatpush1.msra.mxu0 %v1215
    %1277 = vmatprep.subr.mxu0 0.0
    %1278 = vmatpush1.msra.mxu0 %v1214
    %1279 = vmatprep.subr.mxu0 0.0
    %1280 = vmatpush1.msra.mxu0 %v1213
    %1281 = vmatprep.subr.mxu0 0.0
    %1282 = vmatpush2.msra.mxu0 0.0
    %1283 = vmatprep.subr.mxu0 0.0
    %1284 = vmatpush2.msra.mxu0 0.0
    %1285 = vmatprep.subr.mxu0 0.0
    %1286 = vmatpush2.msra.mxu0 0.0
    %1287 = vmatprep.subr.mxu0 0.0
    %1288 = vmatpush2.msra.mxu0 0.0
    %1289 = vmatprep.subr.mxu0 0.0
    %1290 = vmatpush2.msra.mxu0 0.0
    %1291 = vmatprep.subr.mxu0 0.0
    %1292 = vmatpush2.msra.mxu0 0.0
    %1293 = vmatprep.subr.mxu0 0.0
    %1294 = vmatpush2.msra.mxu0 0.0
    %1295 = vmatprep.subr.mxu0 0.0
    %1296 = vmatpush2.msra.mxu0 0.0
    %1297 = vmatprep.subr.mxu0 0.0
    %1298 = vmatpush2.msra.mxu0 0.0
    %1299 = vmatprep.subr.mxu0 0.0
    %1300 = vmatpush2.msra.mxu0 0.0
    %1301 = vmatprep.subr.mxu0 0.0
    %1302 = vmatpush2.msra.mxu0 0.0
    %1303 = vmatprep.subr.mxu0 0.0
    %1304 = vmatpush2.msra.mxu0 0.0
    %1305 = vmatprep.subr.mxu0 0.0
    %1306 = vmatpush2.msra.mxu0 0.0
    %1307 = vmatprep.subr.mxu0 0.0
    %1308 = vmatpush2.msra.mxu0 0.0
    %1309 = vmatprep.subr.mxu0 0.0
    %1310 = vmatpush2.msra.mxu0 0.0
    %1311 = vmatprep.subr.mxu0 0.0
    %1312 = vmatpush2.msra.mxu0 0.0
    %1313 = vmatprep.mubr.f32.mxu0 0.0
    %1314 = vmatmul.mubr.f32.gmra.mxu0 %v1238
    %v1315 = vpop.f32.mrf.mxu0
    %v1316 = vadd.f32 %v1223, %v1315
    %v1317 = vpop.f32.mrf.mxu0
    %1318 = vmatprep.mubr.f32.mxu0 0.0
    %1319 = vmatmul.mubr.f32.gmra.mxu0 %v1241
    %v1320 = vpop.f32.mrf.mxu0
    %v1321 = vadd.f32 %v1227, %v1320
    %v1322 = vpop.f32.mrf.mxu0
    %1323 = vmatprep.mubr.f32.mxu0 0.0
    %1324 = vmatmul.mubr.f32.gmra.mxu0 %v1244
    %v1325 = vpop.f32.mrf.mxu0
    %v1326 = vadd.f32 %v1231, %v1325
    %v1327 = vpop.f32.mrf.mxu0
    %1328 = vmatprep.mubr.f32.mxu0 0.0
    %1329 = vmatmul.mubr.f32.gmra.mxu0 %v1247
    %v1330 = vpop.f32.mrf.mxu0
    %v1331 = vadd.f32 %v1235, %v1330
    %v1332 = vpop.f32.mrf.mxu0
    %1333 = vdwg.mxu0
    %1334 = vst [vmem:[%s9] sm:$0xff] %v1316
    %1335 = vst [vmem:[%s9 + $0x8] sm:$0xff] %v1321
    %1336 = vst [vmem:[%s9 + $0x10] sm:$0xff] %v1326
    %1337 = vst [vmem:[%s9 + $0x18] sm:$0xff] %v1331
    // Predicated region
    $region42: #{attention_forward.1} parent=1 // pred_check
      _
    $region43: #{attention_forward.1} parent=1 // pred_check_branch
      %1339 = sbr.rel (0) target = $region45
    $region44: #{attention_forward.1} parent=1 // pred_region
      _
    $region45: #{attention_forward.1} parent=1 // pred_fallthru
      _
    // Predicated region
    $region46: #{attention_forward.1} parent=1 // pred_check
      _
    $region47: #{attention_forward.1} parent=1 // pred_check_branch
      %1341 = sbr.rel (0) target = $region49
    $region48: #{attention_forward.1} parent=1 // pred_region
      _
    $region49: #{attention_forward.1} parent=1 // pred_fallthru
      _
    %1342 = vsyncpa [#allocation3], 1

</llo_original>
